<compile_context>
chip_gen: v7x
topology: tpu7x:2x2x1
jax: 0.10.0
libtpu: 0.0.40
codegen_flags: <defaults>
</compile_context>

<pallas_src>
import jax
import jax.numpy as jnp
import numpy as np
from jax import lax
from jax.experimental import pallas as pl
from jax.experimental.pallas import tpu as pltpu


# ----------------------------------------------------------------------------
# Fused Pallas kernel (one batch element per grid step)
# ----------------------------------------------------------------------------
def _make_fused_kernel(Wp2, Lcp, padl, cin, k, has_skip, conv1_3x3):
    # Tap offsets of a 3x3 / pad-1 conv in padded-flat indexing (row width Wp2).
    offs = tuple(dy * Wp2 + dx for dy in (-1, 0, 1) for dx in (-1, 0, 1))

    def zero_guards(g_ref, c):
        # Only the guard bands — the interior is rewritten every step.
        z = jnp.zeros((c, padl), jnp.float32)
        g_ref[:, 0:padl] = z
        g_ref[:, padl + Lcp:padl + Lcp + padl] = z

    def conv3x3(g_ref, tap_ref, w_ref, b_ref, c):
        # g_ref : (c, padl + Lcp + padl) padded-flat, zero guard bands.
        # tap_ref: (>= 9*c, Lcp) f32 scratch (sublane-stacked im2col).
        # w_ref : (Cout, 9*c) bf16 ; b_ref : (Cout, 1) f32.
        for t, off in enumerate(offs):
            tap_ref[t * c:(t + 1) * c, :] = g_ref[:, padl + off:padl + off + Lcp]
        acc = jnp.dot(w_ref[...], tap_ref[0:9 * c, :].astype(jnp.bfloat16),
                      preferred_element_type=jnp.float32)
        return jnp.maximum(acc + b_ref[...], 0.0)

    def mm(w_ref, x):
        return jnp.dot(w_ref[...], x.astype(jnp.bfloat16),
                       preferred_element_type=jnp.float32)

    def kernel(*refs):
        it = iter(refs)
        xin_ref = next(it)
        x1_ref = next(it) if has_skip else None
        mask_ref = next(it)
        w1_ref, b1_ref = next(it), next(it)
        w2_ref, b2_ref = next(it), next(it)
        w3_ref, b3_ref = next(it), next(it)
        w4_ref, b4_ref = next(it), next(it)
        w5_ref, b5_ref = next(it), next(it)
        w6a_ref, w6b_ref, w6c_ref = next(it), next(it), next(it)
        w6s_ref = next(it) if has_skip else None
        b6_ref = next(it)
        o_ref = next(it)
        g0_ref = next(it) if conv1_3x3 else None
        g2_ref, g4_ref, tap_ref = next(it), next(it), next(it)

        zero_guards(g2_ref, k)
        zero_guards(g4_ref, k)

        mask = mask_ref[...]                                    # (1, Lcp) f32

        # conv1 (3x3, stride 1 or 2), bias + ReLU.                     (k, Lcp)
        if conv1_3x3:
            zero_guards(g0_ref, cin)
            g0_ref[:, padl:padl + Lcp] = xin_ref[0].astype(jnp.float32)
            d1 = conv3x3(g0_ref, tap_ref, w1_ref, b1_ref, cin)
        else:
            d1 = jnp.maximum(
                jnp.dot(w1_ref[...], xin_ref[0],
                        preferred_element_type=jnp.float32) + b1_ref[...], 0.0)

        # conv2 (1x1): bias + ReLU, border/tail-masked, into scratch interior
        # (the zero guard bands provide the 3x3 halo for conv3).
        g2_ref[:, padl:padl + Lcp] = \
            jnp.maximum(mm(w2_ref, d1) + b2_ref[...], 0.0) * mask

        # conv3 (3x3, stride 1): single K = 9*k matmul over stacked taps.
        d2 = conv3x3(g2_ref, tap_ref, w3_ref, b3_ref, k)        # (k//2, Lcp)

        # conv4 (1x1), masked, into the second scratch.
        g4_ref[:, padl:padl + Lcp] = \
            jnp.maximum(mm(w4_ref, d2) + b4_ref[...], 0.0) * mask

        # conv5 (3x3, stride 1).
        d3 = conv3x3(g4_ref, tap_ref, w5_ref, b5_ref, k)        # (k//2, Lcp)

        # conv6: 1x1 over the implicit [d1, d2, d3, skip] concat via
        # split-weight accumulation — the concat is never materialized.
        acc = mm(w6a_ref, d1) + mm(w6b_ref, d2) + mm(w6c_ref, d3)
        if has_skip:
            acc = acc + jnp.dot(w6s_ref[...], x1_ref[0],
                                preferred_element_type=jnp.float32)
        o_ref[0] = jnp.maximum(acc + b6_ref[...], 0.0)

    return kernel


def _const_spec(a):
    # Whole-array block, constant index map -> stays resident across grid steps.
    return pl.BlockSpec(a.shape, lambda n: (0, 0))


# ----------------------------------------------------------------------------
# Forward wrapper (wrapper-side ops are pure data movement in XLA/HBM)
# ----------------------------------------------------------------------------
def _selecsls_forward(params, x0, x1, stride, is_first):
    N, cin, H, W = x0.shape
    k = params["b2"].shape[0]
    oup = params["b6"].shape[0]
    s = stride

    Ho = (H + 2 - 3) // s + 1
    Wo = (W + 2 - 3) // s + 1
    Hp2, Wp2 = Ho + 2, Wo + 2
    Lp = Hp2 * Wp2
    G = Wp2 + 1                       # max |tap offset| in padded-flat indexing
    Lc = Lp - 2 * G                   # contiguous compute range [G, Lp - G)
    # Lane-dense width: multiple of 128, >= Lc + 2 so the epilogue crop is a
    # plain slice + reshape (first Ho rows of width Wp2).
    Lcp = ((Lc + 2 + 127) // 128) * 128
    padl = ((G + 127) // 128) * 128   # lane-aligned guard width (>= G)
    Lg = padl + Lcp + padl

    def flat(a_pad, dtype):
        # (n, C, Hp2, Wp2) padded NCHW -> (n, C, Lcp) padded-flat, lane-dense.
        n, c = a_pad.shape[0], a_pad.shape[1]
        f = a_pad.reshape(n, c, Lp)[:, :, G:]
        if f.shape[-1] < Lcp:
            f = jnp.pad(f, ((0, 0), (0, 0), (0, Lcp - f.shape[-1])))
        else:
            f = f[:, :, :Lcp]
        return f.astype(dtype)

    conv1_3x3 = (s == 1)
    if conv1_3x3:
        # Raw input in padded-flat layout; conv1 taps are formed in-kernel.
        xin = flat(jnp.pad(x0, ((0, 0), (0, 0), (1, 1), (1, 1))), jnp.bfloat16)
        cin_in = cin
    else:
        # Stride-2 block: wrapper im2col on the (padded) output grid.
        xpad = jnp.pad(x0, ((0, 0), (0, 0), (1, 1), (1, 1)))
        taps = [xpad[:, :, a:a + s * Ho:s, b:b + s * Wo:s]
                for a in range(3) for b in range(3)]
        pat = jnp.concatenate(taps, axis=1)                  # (N, 9*cin, Ho, Wo)
        pat = jnp.pad(pat, ((0, 0), (0, 0), (1, 1), (1, 1)))
        xin = flat(pat, jnp.bfloat16)                        # (N, 9*cin, Lcp)
        cin_in = 9 * cin

    # Interior mask: 1 on valid output positions, 0 on the border ring and on
    # the lane-padding tail columns (>= Lc).
    m2d = jnp.pad(jnp.ones((1, 1, Ho, Wo), jnp.float32),
                  ((0, 0), (0, 0), (1, 1), (1, 1)))
    mask = flat(m2d, jnp.float32)[0]                         # (1, Lcp)

    has_skip = not is_first
    args = [xin]
    in_specs = [pl.BlockSpec((1, cin_in, Lcp), lambda n: (n, 0, 0))]
    if has_skip:
        skip_c = x1.shape[1]
        x1f = flat(jnp.pad(x1, ((0, 0), (0, 0), (1, 1), (1, 1))), jnp.bfloat16)
        args.append(x1f)
        in_specs.append(pl.BlockSpec((1, skip_c, Lcp), lambda n: (n, 0, 0)))

    args.append(mask)
    in_specs.append(_const_spec(mask))
    const_names = ["w1r", "b1", "w2t", "b2", "w3r", "b3", "w4t", "b4",
                   "w5r", "b5", "w6at", "w6bt", "w6ct"]
    if has_skip:
        const_names.append("w6st")
    const_names.append("b6")
    for name in const_names:
        a = params[name]
        args.append(a)
        in_specs.append(_const_spec(a))

    trows = 9 * (max(cin, k) if conv1_3x3 else k)
    scratch_shapes = []
    if conv1_3x3:
        scratch_shapes.append(pltpu.VMEM((cin, Lg), jnp.float32))
    scratch_shapes += [pltpu.VMEM((k, Lg), jnp.float32),
                       pltpu.VMEM((k, Lg), jnp.float32),
                       pltpu.VMEM((trows, Lcp), jnp.float32)]

    out = pl.pallas_call(
        _make_fused_kernel(Wp2, Lcp, padl, cin, k, has_skip, conv1_3x3),
        out_shape=jax.ShapeDtypeStruct((N, oup, Lcp), jnp.float32),
        grid=(N,),
        in_specs=in_specs,
        out_specs=pl.BlockSpec((1, oup, Lcp), lambda n: (n, 0, 0)),
        scratch_shapes=scratch_shapes,
        compiler_params=pltpu.CompilerParams(
            dimension_semantics=("parallel",)),
    )(*args)

    # Column q of the lane-dense output corresponds to padded-grid position
    # q + G, i.e. output pixel (q // Wp2, q % Wp2); crop is slice+reshape+slice.
    out = out[:, :, :Ho * Wp2].reshape(N, oup, Ho, Wp2)
    return out[:, :, :, :Wo]


_selecsls_forward_jit = jax.jit(_selecsls_forward, static_argnums=(3, 4))


# ----------------------------------------------------------------------------
# Module (deterministic in-script parameter init; BN folded into a bias)
# ----------------------------------------------------------------------------
class SelecSLSBlockPallas:
    def __init__(self, key, inp, skip, k, oup, isFirst, stride):
        assert stride in [1, 2]
        self.inp, self.skip, self.k, self.oup = inp, skip, k, oup
        self.isFirst, self.stride = isFirst, stride
        kh = k // 2
        ks = jax.random.split(key, 15)

        def w3x3(kk, cin, cout):
            return 0.1 * jax.random.normal(kk, (3, 3, cin, cout), jnp.float32)

        def w1x1(kk, cin, cout):
            return 0.1 * jax.random.normal(kk, (cin, cout), jnp.float32)

        def bias(kk, cout):
            return 0.05 * jax.random.normal(kk, (cout,), jnp.float32)

        # Canonical parameters: HWIO 3x3 weights, (Cin, Cout) 1x1 weights,
        # per-channel bias = folded eval-mode BatchNorm affine.
        self.w1, self.b1 = w3x3(ks[0], inp, k), bias(ks[1], k)
        self.w2, self.b2 = w1x1(ks[2], k, k), bias(ks[3], k)
        self.w3, self.b3 = w3x3(ks[4], k, kh), bias(ks[5], kh)
        self.w4, self.b4 = w1x1(ks[6], kh, k), bias(ks[7], k)
        self.w5, self.b5 = w3x3(ks[8], k, kh), bias(ks[9], kh)
        self.w6_d1 = w1x1(ks[10], k, oup)
        self.w6_d2 = w1x1(ks[11], kh, oup)
        self.w6_d3 = w1x1(ks[12], kh, oup)
        self.w6_x1 = None if isFirst else w1x1(ks[13], skip, oup)
        self.b6 = bias(ks[14], oup)

        # Kernel-layout parameters: (Cout, K) bf16 weights (K = Cin or 9*Cin in
        # tap-major order, matching the in-kernel tap stacking and the wrapper
        # im2col), f32 (C, 1) biases (lane-broadcast).
        bf = jnp.bfloat16
        p = {
            "w1r": jnp.transpose(self.w1, (3, 0, 1, 2)).reshape(k, 9 * inp).astype(bf),
            "b1": self.b1.reshape(k, 1),
            "w2t": self.w2.T.astype(bf), "b2": self.b2.reshape(k, 1),
            "w3r": jnp.transpose(self.w3, (3, 0, 1, 2)).reshape(kh, 9 * k).astype(bf),
            "b3": self.b3.reshape(kh, 1),
            "w4t": self.w4.T.astype(bf), "b4": self.b4.reshape(k, 1),
            "w5r": jnp.transpose(self.w5, (3, 0, 1, 2)).reshape(kh, 9 * k).astype(bf),
            "b5": self.b5.reshape(kh, 1),
            "w6at": self.w6_d1.T.astype(bf), "w6bt": self.w6_d2.T.astype(bf),
            "w6ct": self.w6_d3.T.astype(bf),
            "b6": self.b6.reshape(oup, 1),
        }
        if not isFirst:
            p["w6st"] = self.w6_x1.T.astype(bf)
        self._kernel_params = p

    def __call__(self, x_list):
        # x_list: list of NCHW tensors, len 1 or 2 (PyTorch convention).
        assert isinstance(x_list, list) and len(x_list) in [1, 2]
        x1 = None if self.isFirst else x_list[1]
        out = _selecsls_forward_jit(self._kernel_params, x_list[0], x1,
                                    self.stride, self.isFirst)
        if self.isFirst:
            return [out, out]
        return [out, x_list[1]]


# ----------------------------------------------------------------------------
# Pure-JAX f32 reference (correctness check only)
# ----------------------------------------------------------------------------
def _ref_forward(blk, x_list):
    def conv3x3(x, w, b, stride):
        y = lax.conv_general_dilated(
            x, w, (stride, stride), ((1, 1), (1, 1)),
            dimension_numbers=("NCHW", "HWIO", "NCHW"))
        return jnp.maximum(y + b[None, :, None, None], 0.0)

    def conv1x1(x, w, b):
        y = jnp.einsum("nchw,cd->ndhw", x, w)
        return jnp.maximum(y + b[None, :, None, None], 0.0)

    d1 = conv3x3(x_list[0], blk.w1, blk.b1, blk.stride)
    d2 = conv3x3(conv1x1(d1, blk.w2, blk.b2), blk.w3, blk.b3, 1)
    d3 = conv3x3(conv1x1(d2, blk.w4, blk.b4), blk.w5, blk.b5, 1)
    if blk.isFirst:
        w6 = jnp.concatenate([blk.w6_d1, blk.w6_d2, blk.w6_d3], axis=0)
        out = conv1x1(jnp.concatenate([d1, d2, d3], axis=1), w6, blk.b6)
        return [out, out]
    w6 = jnp.concatenate([blk.w6_d1, blk.w6_d2, blk.w6_d3, blk.w6_x1], axis=0)
    out = conv1x1(jnp.concatenate([d1, d2, d3, x_list[1]], axis=1), w6, blk.b6)
    return [out, x_list[1]]


# ----------------------------------------------------------------------------
if __name__ == "__main__":
    key = jax.random.PRNGKey(0)
    kp1, kp2, kx0, kx1 = jax.random.split(key, 4)

    inp, skip, k, oup = 4, 8, 8, 16
    N, H, W = 2, 16, 16

    x0 = jax.random.normal(kx0, (N, inp, H, W), jnp.float32)    # NCHW
    x1 = jax.random.normal(kx1, (N, skip, H, W), jnp.float32)   # NCHW

    # Kernel uses bf16 weights/activations with f32 accumulation; the reference
    # is pure f32, hence the loosened tolerance.
    TOL = dict(rtol=2e-2, atol=2e-2)

    # Case 1: non-first block, stride 1 (skip branch + in-kernel conv1 taps).
    blk = SelecSLSBlockPallas(kp1, inp, skip, k, oup, isFirst=False, stride=1)
    out = blk([x0, x1])
    jax.block_until_ready(out)
    ref = _ref_forward(blk, [x0, x1])
    np.testing.assert_allclose(np.asarray(out[0]), np.asarray(ref[0]), **TOL)
    np.testing.assert_allclose(np.asarray(out[1]), np.asarray(ref[1]), **TOL)

    # Case 2: first block, stride 2, single input (wrapper im2col path).
    blk_f = SelecSLSBlockPallas(kp2, inp, skip, k, oup, isFirst=True, stride=2)
    out_f = blk_f([x0])
    jax.block_until_ready(out_f)
    ref_f = _ref_forward(blk_f, [x0])
    np.testing.assert_allclose(np.asarray(out_f[0]), np.asarray(ref_f[0]), **TOL)
    np.testing.assert_allclose(np.asarray(out_f[1]), np.asarray(ref_f[1]), **TOL)

    print("KERNEL_OK")
</pallas_src>

<mosaic_0001>
module attributes {stable_mosaic.version = 11 : i64} {
  func.func @kernel(%arg0: i32, %arg1: memref<1x4x384xbf16, #tpu.memory_space<vmem>>, %arg2: memref<1x8x384xbf16, #tpu.memory_space<vmem>>, %arg3: memref<1x384xf32, #tpu.memory_space<vmem>>, %arg4: memref<8x36xbf16, #tpu.memory_space<vmem>>, %arg5: memref<8x1xf32, #tpu.memory_space<vmem>>, %arg6: memref<8x8xbf16, #tpu.memory_space<vmem>>, %arg7: memref<8x1xf32, #tpu.memory_space<vmem>>, %arg8: memref<4x72xbf16, #tpu.memory_space<vmem>>, %arg9: memref<4x1xf32, #tpu.memory_space<vmem>>, %arg10: memref<8x4xbf16, #tpu.memory_space<vmem>>, %arg11: memref<8x1xf32, #tpu.memory_space<vmem>>, %arg12: memref<4x72xbf16, #tpu.memory_space<vmem>>, %arg13: memref<4x1xf32, #tpu.memory_space<vmem>>, %arg14: memref<16x8xbf16, #tpu.memory_space<vmem>>, %arg15: memref<16x4xbf16, #tpu.memory_space<vmem>>, %arg16: memref<16x4xbf16, #tpu.memory_space<vmem>>, %arg17: memref<16x8xbf16, #tpu.memory_space<vmem>>, %arg18: memref<16x1xf32, #tpu.memory_space<vmem>>, %arg19: memref<1x16x384xf32, #tpu.memory_space<vmem>>, %arg20: memref<4x640xf32, #tpu.memory_space<vmem>>, %arg21: memref<8x640xf32, #tpu.memory_space<vmem>>, %arg22: memref<8x640xf32, #tpu.memory_space<vmem>>, %arg23: memref<72x384xf32, #tpu.memory_space<vmem>>) attributes {dimension_semantics = [#tpu.dimension_semantics<parallel>], iteration_bounds = array<i64: 2>, scalar_prefetch = 0 : i64, scratch_operands = 4 : i64, tpu.core_type = #tpu.core_type<tc>, window_params = [{transform_indices = @transform_0, window_bounds = array<i64: 1, 4, 384>}, {transform_indices = @transform_1, window_bounds = array<i64: 1, 8, 384>}, {pipeline_mode = #tpu.pipeline_mode<synchronous>, transform_indices = @transform_2, window_bounds = array<i64: 1, 384>}, {pipeline_mode = #tpu.pipeline_mode<synchronous>, transform_indices = @transform_3, window_bounds = array<i64: 8, 36>}, {pipeline_mode = #tpu.pipeline_mode<synchronous>, transform_indices = @transform_4, window_bounds = array<i64: 8, 1>}, {pipeline_mode = #tpu.pipeline_mode<synchronous>, transform_indices = @transform_5, window_bounds = array<i64: 8, 8>}, {pipeline_mode = #tpu.pipeline_mode<synchronous>, transform_indices = @transform_6, window_bounds = array<i64: 8, 1>}, {pipeline_mode = #tpu.pipeline_mode<synchronous>, transform_indices = @transform_7, window_bounds = array<i64: 4, 72>}, {pipeline_mode = #tpu.pipeline_mode<synchronous>, transform_indices = @transform_8, window_bounds = array<i64: 4, 1>}, {pipeline_mode = #tpu.pipeline_mode<synchronous>, transform_indices = @transform_9, window_bounds = array<i64: 8, 4>}, {pipeline_mode = #tpu.pipeline_mode<synchronous>, transform_indices = @transform_10, window_bounds = array<i64: 8, 1>}, {pipeline_mode = #tpu.pipeline_mode<synchronous>, transform_indices = @transform_11, window_bounds = array<i64: 4, 72>}, {pipeline_mode = #tpu.pipeline_mode<synchronous>, transform_indices = @transform_12, window_bounds = array<i64: 4, 1>}, {pipeline_mode = #tpu.pipeline_mode<synchronous>, transform_indices = @transform_13, window_bounds = array<i64: 16, 8>}, {pipeline_mode = #tpu.pipeline_mode<synchronous>, transform_indices = @transform_14, window_bounds = array<i64: 16, 4>}, {pipeline_mode = #tpu.pipeline_mode<synchronous>, transform_indices = @transform_15, window_bounds = array<i64: 16, 4>}, {pipeline_mode = #tpu.pipeline_mode<synchronous>, transform_indices = @transform_16, window_bounds = array<i64: 16, 8>}, {pipeline_mode = #tpu.pipeline_mode<synchronous>, transform_indices = @transform_17, window_bounds = array<i64: 16, 1>}, {transform_indices = @transform_18, window_bounds = array<i64: 1, 16, 384>}]} {
    %cst = arith.constant 0.000000e+00 : f32
    %0 = vector.broadcast %cst : f32 to vector<8x128xf32>
    %c0 = arith.constant 0 : index
    %c0_0 = arith.constant 0 : index
    %1 = vector.load %arg21[%c0, %c0_0] : memref<8x640xf32, #tpu.memory_space<vmem>>, vector<8x128xf32>
    tpu.vector_store %arg21[%c0, %c0_0], %0 {strides = array<i32>} : memref<8x640xf32, #tpu.memory_space<vmem>>, vector<8x128xf32>,
    %c0_1 = arith.constant 0 : index
    %c512 = arith.constant 512 : index
    %2 = vector.load %arg21[%c0_1, %c512] : memref<8x640xf32, #tpu.memory_space<vmem>>, vector<8x128xf32>
    tpu.vector_store %arg21[%c0_1, %c512], %0 {strides = array<i32>} : memref<8x640xf32, #tpu.memory_space<vmem>>, vector<8x128xf32>,
    %cst_2 = arith.constant 0.000000e+00 : f32
    %3 = vector.broadcast %cst_2 : f32 to vector<8x128xf32>
    %c0_3 = arith.constant 0 : index
    %c0_4 = arith.constant 0 : index
    %4 = vector.load %arg22[%c0_3, %c0_4] : memref<8x640xf32, #tpu.memory_space<vmem>>, vector<8x128xf32>
    tpu.vector_store %arg22[%c0_3, %c0_4], %3 {strides = array<i32>} : memref<8x640xf32, #tpu.memory_space<vmem>>, vector<8x128xf32>,
    %c0_5 = arith.constant 0 : index
    %c512_6 = arith.constant 512 : index
    %5 = vector.load %arg22[%c0_5, %c512_6] : memref<8x640xf32, #tpu.memory_space<vmem>>, vector<8x128xf32>
    tpu.vector_store %arg22[%c0_5, %c512_6], %3 {strides = array<i32>} : memref<8x640xf32, #tpu.memory_space<vmem>>, vector<8x128xf32>,
    %c0_7 = arith.constant 0 : index
    %c0_8 = arith.constant 0 : index
    %6 = vector.load %arg3[%c0_7, %c0_8] : memref<1x384xf32, #tpu.memory_space<vmem>>, vector<1x384xf32>
    %cst_9 = arith.constant 0.000000e+00 : f32
    %7 = vector.broadcast %cst_9 : f32 to vector<4x128xf32>
    %c0_10 = arith.constant 0 : index
    %c0_11 = arith.constant 0 : index
    %8 = vector.load %arg20[%c0_10, %c0_11] : memref<4x640xf32, #tpu.memory_space<vmem>>, vector<4x128xf32>
    tpu.vector_store %arg20[%c0_10, %c0_11], %7 {strides = array<i32>} : memref<4x640xf32, #tpu.memory_space<vmem>>, vector<4x128xf32>,
    %c0_12 = arith.constant 0 : index
    %c512_13 = arith.constant 512 : index
    %9 = vector.load %arg20[%c0_12, %c512_13] : memref<4x640xf32, #tpu.memory_space<vmem>>, vector<4x128xf32>
    tpu.vector_store %arg20[%c0_12, %c512_13], %7 {strides = array<i32>} : memref<4x640xf32, #tpu.memory_space<vmem>>, vector<4x128xf32>,
    %c0_14 = arith.constant 0 : index
    %c0_15 = arith.constant 0 : index
    %c0_16 = arith.constant 0 : index
    %10 = vector.load %arg1[%c0_14, %c0_15, %c0_16] : memref<1x4x384xbf16, #tpu.memory_space<vmem>>, vector<1x4x384xbf16>
    %11 = vector.shape_cast %10 : vector<1x4x384xbf16> to vector<4x384xbf16>
    %12 = arith.extf %11 : vector<4x384xbf16> to vector<4x384xf32>
    %c0_17 = arith.constant 0 : index
    %c128 = arith.constant 128 : index
    %13 = vector.load %arg20[%c0_17, %c128] : memref<4x640xf32, #tpu.memory_space<vmem>>, vector<4x384xf32>
    tpu.vector_store %arg20[%c0_17, %c128], %12 {strides = array<i32>} : memref<4x640xf32, #tpu.memory_space<vmem>>, vector<4x384xf32>,
    %c0_18 = arith.constant 0 : index
    %c109 = arith.constant 109 : index
    %14 = vector.load %arg20[%c0_18, %c109] : memref<4x640xf32, #tpu.memory_space<vmem>>, vector<4x384xf32>
    %c0_19 = arith.constant 0 : index
    %c0_20 = arith.constant 0 : index
    %15 = vector.load %arg23[%c0_19, %c0_20] : memref<72x384xf32, #tpu.memory_space<vmem>>, vector<4x384xf32>
    tpu.vector_store %arg23[%c0_19, %c0_20], %14 {strides = array<i32>} : memref<72x384xf32, #tpu.memory_space<vmem>>, vector<4x384xf32>,
    %c0_21 = arith.constant 0 : index
    %c110 = arith.constant 110 : index
    %16 = vector.load %arg20[%c0_21, %c110] : memref<4x640xf32, #tpu.memory_space<vmem>>, vector<4x384xf32>
    %c4 = arith.constant 4 : index
    %c0_22 = arith.constant 0 : index
    %17 = vector.load %arg23[%c4, %c0_22] : memref<72x384xf32, #tpu.memory_space<vmem>>, vector<4x384xf32>
    tpu.vector_store %arg23[%c4, %c0_22], %16 {strides = array<i32>} : memref<72x384xf32, #tpu.memory_space<vmem>>, vector<4x384xf32>,
    %c0_23 = arith.constant 0 : index
    %c111 = arith.constant 111 : index
    %18 = vector.load %arg20[%c0_23, %c111] : memref<4x640xf32, #tpu.memory_space<vmem>>, vector<4x384xf32>
    %c8 = arith.constant 8 : index
    %c0_24 = arith.constant 0 : index
    %19 = vector.load %arg23[%c8, %c0_24] : memref<72x384xf32, #tpu.memory_space<vmem>>, vector<4x384xf32>
    tpu.vector_store %arg23[%c8, %c0_24], %18 {strides = array<i32>} : memref<72x384xf32, #tpu.memory_space<vmem>>, vector<4x384xf32>,
    %c0_25 = arith.constant 0 : index
    %c127 = arith.constant 127 : index
    %20 = vector.load %arg20[%c0_25, %c127] : memref<4x640xf32, #tpu.memory_space<vmem>>, vector<4x384xf32>
    %c12 = arith.constant 12 : index
    %c0_26 = arith.constant 0 : index
    %21 = vector.load %arg23[%c12, %c0_26] : memref<72x384xf32, #tpu.memory_space<vmem>>, vector<4x384xf32>
    tpu.vector_store %arg23[%c12, %c0_26], %20 {strides = array<i32>} : memref<72x384xf32, #tpu.memory_space<vmem>>, vector<4x384xf32>,
    %c0_27 = arith.constant 0 : index
    %c128_28 = arith.constant 128 : index
    %22 = vector.load %arg20[%c0_27, %c128_28] : memref<4x640xf32, #tpu.memory_space<vmem>>, vector<4x384xf32>
    %c16 = arith.constant 16 : index
    %c0_29 = arith.constant 0 : index
    %23 = vector.load %arg23[%c16, %c0_29] : memref<72x384xf32, #tpu.memory_space<vmem>>, vector<4x384xf32>
    tpu.vector_store %arg23[%c16, %c0_29], %22 {strides = array<i32>} : memref<72x384xf32, #tpu.memory_space<vmem>>, vector<4x384xf32>,
    %c0_30 = arith.constant 0 : index
    %c129 = arith.constant 129 : index
    %24 = vector.load %arg20[%c0_30, %c129] : memref<4x640xf32, #tpu.memory_space<vmem>>, vector<4x384xf32>
    %c20 = arith.constant 20 : index
    %c0_31 = arith.constant 0 : index
    %25 = vector.load %arg23[%c20, %c0_31] : memref<72x384xf32, #tpu.memory_space<vmem>>, vector<4x384xf32>
    tpu.vector_store %arg23[%c20, %c0_31], %24 {strides = array<i32>} : memref<72x384xf32, #tpu.memory_space<vmem>>, vector<4x384xf32>,
    %c0_32 = arith.constant 0 : index
    %c145 = arith.constant 145 : index
    %26 = vector.load %arg20[%c0_32, %c145] : memref<4x640xf32, #tpu.memory_space<vmem>>, vector<4x384xf32>
    %c24 = arith.constant 24 : index
    %c0_33 = arith.constant 0 : index
    %27 = vector.load %arg23[%c24, %c0_33] : memref<72x384xf32, #tpu.memory_space<vmem>>, vector<4x384xf32>
    tpu.vector_store %arg23[%c24, %c0_33], %26 {strides = array<i32>} : memref<72x384xf32, #tpu.memory_space<vmem>>, vector<4x384xf32>,
    %c0_34 = arith.constant 0 : index
    %c146 = arith.constant 146 : index
    %28 = vector.load %arg20[%c0_34, %c146] : memref<4x640xf32, #tpu.memory_space<vmem>>, vector<4x384xf32>
    %c28 = arith.constant 28 : index
    %c0_35 = arith.constant 0 : index
    %29 = vector.load %arg23[%c28, %c0_35] : memref<72x384xf32, #tpu.memory_space<vmem>>, vector<4x384xf32>
    tpu.vector_store %arg23[%c28, %c0_35], %28 {strides = array<i32>} : memref<72x384xf32, #tpu.memory_space<vmem>>, vector<4x384xf32>,
    %c0_36 = arith.constant 0 : index
    %c147 = arith.constant 147 : index
    %30 = vector.load %arg20[%c0_36, %c147] : memref<4x640xf32, #tpu.memory_space<vmem>>, vector<4x384xf32>
    %c32 = arith.constant 32 : index
    %c0_37 = arith.constant 0 : index
    %31 = vector.load %arg23[%c32, %c0_37] : memref<72x384xf32, #tpu.memory_space<vmem>>, vector<4x384xf32>
    tpu.vector_store %arg23[%c32, %c0_37], %30 {strides = array<i32>} : memref<72x384xf32, #tpu.memory_space<vmem>>, vector<4x384xf32>,
    %c0_38 = arith.constant 0 : index
    %c0_39 = arith.constant 0 : index
    %32 = vector.load %arg4[%c0_38, %c0_39] : memref<8x36xbf16, #tpu.memory_space<vmem>>, vector<8x36xbf16>
    %c0_40 = arith.constant 0 : index
    %c0_41 = arith.constant 0 : index
    %33 = vector.load %arg23[%c0_40, %c0_41] : memref<72x384xf32, #tpu.memory_space<vmem>>, vector<36x384xf32>
    %34 = arith.truncf %33 : vector<36x384xf32> to vector<36x384xbf16>
    %cst_42 = arith.constant dense<0.000000e+00> : vector<8x384xf32>
    %35 = tpu.matmul %32, %34, %cst_42 {dimension_numbers = #tpu.dot_dimension_numbers<[1], [0], [0], [1], [0, 0, 1, 1], [], []>} : vector<8x36xbf16>, vector<36x384xbf16>, vector<8x384xf32> -> vector<8x384xf32>
    %c0_43 = arith.constant 0 : index
    %c0_44 = arith.constant 0 : index
    %36 = vector.load %arg5[%c0_43, %c0_44] : memref<8x1xf32, #tpu.memory_space<vmem>>, vector<8x1xf32>
    %37 = vector.broadcast %36 : vector<8x1xf32> to vector<8x384xf32>
    %38 = arith.addf %35, %37 : vector<8x384xf32>
    %cst_45 = arith.constant 0.000000e+00 : f32
    %39 = vector.broadcast %cst_45 : f32 to vector<8x384xf32>
    %40 = arith.maximumf %38, %39 : vector<8x384xf32>
    %c0_46 = arith.constant 0 : index
    %c0_47 = arith.constant 0 : index
    %41 = vector.load %arg6[%c0_46, %c0_47] : memref<8x8xbf16, #tpu.memory_space<vmem>>, vector<8x8xbf16>
    %42 = arith.truncf %40 : vector<8x384xf32> to vector<8x384xbf16>
    %cst_48 = arith.constant dense<0.000000e+00> : vector<8x384xf32>
    %43 = tpu.matmul %41, %42, %cst_48 {dimension_numbers = #tpu.dot_dimension_numbers<[1], [0], [0], [1], [0, 0, 1, 1], [], []>} : vector<8x8xbf16>, vector<8x384xbf16>, vector<8x384xf32> -> vector<8x384xf32>
    %c0_49 = arith.constant 0 : index
    %c0_50 = arith.constant 0 : index
    %44 = vector.load %arg7[%c0_49, %c0_50] : memref<8x1xf32, #tpu.memory_space<vmem>>, vector<8x1xf32>
    %45 = vector.broadcast %44 : vector<8x1xf32> to vector<8x384xf32>
    %46 = arith.addf %43, %45 : vector<8x384xf32>
    %cst_51 = arith.constant 0.000000e+00 : f32
    %47 = vector.broadcast %cst_51 : f32 to vector<8x384xf32>
    %48 = arith.maximumf %46, %47 : vector<8x384xf32>
    %49 = vector.broadcast %6 : vector<1x384xf32> to vector<8x384xf32>
    %50 = arith.mulf %48, %49 : vector<8x384xf32>
    %c0_52 = arith.constant 0 : index
    %c128_53 = arith.constant 128 : index
    %51 = vector.load %arg21[%c0_52, %c128_53] : memref<8x640xf32, #tpu.memory_space<vmem>>, vector<8x384xf32>
    tpu.vector_store %arg21[%c0_52, %c128_53], %50 {strides = array<i32>} : memref<8x640xf32, #tpu.memory_space<vmem>>, vector<8x384xf32>,
    %c0_54 = arith.constant 0 : index
    %c109_55 = arith.constant 109 : index
    %52 = vector.load %arg21[%c0_54, %c109_55] : memref<8x640xf32, #tpu.memory_space<vmem>>, vector<8x384xf32>
    %c0_56 = arith.constant 0 : index
    %c0_57 = arith.constant 0 : index
    %53 = vector.load %arg23[%c0_56, %c0_57] : memref<72x384xf32, #tpu.memory_space<vmem>>, vector<8x384xf32>
    tpu.vector_store %arg23[%c0_56, %c0_57], %52 {strides = array<i32>} : memref<72x384xf32, #tpu.memory_space<vmem>>, vector<8x384xf32>,
    %c0_58 = arith.constant 0 : index
    %c110_59 = arith.constant 110 : index
    %54 = vector.load %arg21[%c0_58, %c110_59] : memref<8x640xf32, #tpu.memory_space<vmem>>, vector<8x384xf32>
    %c8_60 = arith.constant 8 : index
    %c0_61 = arith.constant 0 : index
    %55 = vector.load %arg23[%c8_60, %c0_61] : memref<72x384xf32, #tpu.memory_space<vmem>>, vector<8x384xf32>
    tpu.vector_store %arg23[%c8_60, %c0_61], %54 {strides = array<i32>} : memref<72x384xf32, #tpu.memory_space<vmem>>, vector<8x384xf32>,
    %c0_62 = arith.constant 0 : index
    %c111_63 = arith.constant 111 : index
    %56 = vector.load %arg21[%c0_62, %c111_63] : memref<8x640xf32, #tpu.memory_space<vmem>>, vector<8x384xf32>
    %c16_64 = arith.constant 16 : index
    %c0_65 = arith.constant 0 : index
    %57 = vector.load %arg23[%c16_64, %c0_65] : memref<72x384xf32, #tpu.memory_space<vmem>>, vector<8x384xf32>
    tpu.vector_store %arg23[%c16_64, %c0_65], %56 {strides = array<i32>} : memref<72x384xf32, #tpu.memory_space<vmem>>, vector<8x384xf32>,
    %c0_66 = arith.constant 0 : index
    %c127_67 = arith.constant 127 : index
    %58 = vector.load %arg21[%c0_66, %c127_67] : memref<8x640xf32, #tpu.memory_space<vmem>>, vector<8x384xf32>
    %c24_68 = arith.constant 24 : index
    %c0_69 = arith.constant 0 : index
    %59 = vector.load %arg23[%c24_68, %c0_69] : memref<72x384xf32, #tpu.memory_space<vmem>>, vector<8x384xf32>
    tpu.vector_store %arg23[%c24_68, %c0_69], %58 {strides = array<i32>} : memref<72x384xf32, #tpu.memory_space<vmem>>, vector<8x384xf32>,
    %c0_70 = arith.constant 0 : index
    %c128_71 = arith.constant 128 : index
    %60 = vector.load %arg21[%c0_70, %c128_71] : memref<8x640xf32, #tpu.memory_space<vmem>>, vector<8x384xf32>
    %c32_72 = arith.constant 32 : index
    %c0_73 = arith.constant 0 : index
    %61 = vector.load %arg23[%c32_72, %c0_73] : memref<72x384xf32, #tpu.memory_space<vmem>>, vector<8x384xf32>
    tpu.vector_store %arg23[%c32_72, %c0_73], %60 {strides = array<i32>} : memref<72x384xf32, #tpu.memory_space<vmem>>, vector<8x384xf32>,
    %c0_74 = arith.constant 0 : index
    %c129_75 = arith.constant 129 : index
    %62 = vector.load %arg21[%c0_74, %c129_75] : memref<8x640xf32, #tpu.memory_space<vmem>>, vector<8x384xf32>
    %c40 = arith.constant 40 : index
    %c0_76 = arith.constant 0 : index
    %63 = vector.load %arg23[%c40, %c0_76] : memref<72x384xf32, #tpu.memory_space<vmem>>, vector<8x384xf32>
    tpu.vector_store %arg23[%c40, %c0_76], %62 {strides = array<i32>} : memref<72x384xf32, #tpu.memory_space<vmem>>, vector<8x384xf32>,
    %c0_77 = arith.constant 0 : index
    %c145_78 = arith.constant 145 : index
    %64 = vector.load %arg21[%c0_77, %c145_78] : memref<8x640xf32, #tpu.memory_space<vmem>>, vector<8x384xf32>
    %c48 = arith.constant 48 : index
    %c0_79 = arith.constant 0 : index
    %65 = vector.load %arg23[%c48, %c0_79] : memref<72x384xf32, #tpu.memory_space<vmem>>, vector<8x384xf32>
    tpu.vector_store %arg23[%c48, %c0_79], %64 {strides = array<i32>} : memref<72x384xf32, #tpu.memory_space<vmem>>, vector<8x384xf32>,
    %c0_80 = arith.constant 0 : index
    %c146_81 = arith.constant 146 : index
    %66 = vector.load %arg21[%c0_80, %c146_81] : memref<8x640xf32, #tpu.memory_space<vmem>>, vector<8x384xf32>
    %c56 = arith.constant 56 : index
    %c0_82 = arith.constant 0 : index
    %67 = vector.load %arg23[%c56, %c0_82] : memref<72x384xf32, #tpu.memory_space<vmem>>, vector<8x384xf32>
    tpu.vector_store %arg23[%c56, %c0_82], %66 {strides = array<i32>} : memref<72x384xf32, #tpu.memory_space<vmem>>, vector<8x384xf32>,
    %c0_83 = arith.constant 0 : index
    %c147_84 = arith.constant 147 : index
    %68 = vector.load %arg21[%c0_83, %c147_84] : memref<8x640xf32, #tpu.memory_space<vmem>>, vector<8x384xf32>
    %c64 = arith.constant 64 : index
    %c0_85 = arith.constant 0 : index
    %69 = vector.load %arg23[%c64, %c0_85] : memref<72x384xf32, #tpu.memory_space<vmem>>, vector<8x384xf32>
    tpu.vector_store %arg23[%c64, %c0_85], %68 {strides = array<i32>} : memref<72x384xf32, #tpu.memory_space<vmem>>, vector<8x384xf32>,
    %c0_86 = arith.constant 0 : index
    %c0_87 = arith.constant 0 : index
    %70 = vector.load %arg8[%c0_86, %c0_87] : memref<4x72xbf16, #tpu.memory_space<vmem>>, vector<4x72xbf16>
    %c0_88 = arith.constant 0 : index
    %c0_89 = arith.constant 0 : index
    %71 = vector.load %arg23[%c0_88, %c0_89] : memref<72x384xf32, #tpu.memory_space<vmem>>, vector<72x384xf32>
    %72 = arith.truncf %71 : vector<72x384xf32> to vector<72x384xbf16>
    %cst_90 = arith.constant dense<0.000000e+00> : vector<4x384xf32>
    %73 = tpu.matmul %70, %72, %cst_90 {dimension_numbers = #tpu.dot_dimension_numbers<[1], [0], [0], [1], [0, 0, 1, 1], [], []>} : vector<4x72xbf16>, vector<72x384xbf16>, vector<4x384xf32> -> vector<4x384xf32>
    %c0_91 = arith.constant 0 : index
    %c0_92 = arith.constant 0 : index
    %74 = vector.load %arg9[%c0_91, %c0_92] : memref<4x1xf32, #tpu.memory_space<vmem>>, vector<4x1xf32>
    %75 = vector.broadcast %74 : vector<4x1xf32> to vector<4x384xf32>
    %76 = arith.addf %73, %75 : vector<4x384xf32>
    %cst_93 = arith.constant 0.000000e+00 : f32
    %77 = vector.broadcast %cst_93 : f32 to vector<4x384xf32>
    %78 = arith.maximumf %76, %77 : vector<4x384xf32>
    %c0_94 = arith.constant 0 : index
    %c0_95 = arith.constant 0 : index
    %79 = vector.load %arg10[%c0_94, %c0_95] : memref<8x4xbf16, #tpu.memory_space<vmem>>, vector<8x4xbf16>
    %80 = arith.truncf %78 : vector<4x384xf32> to vector<4x384xbf16>
    %cst_96 = arith.constant dense<0.000000e+00> : vector<8x384xf32>
    %81 = tpu.matmul %79, %80, %cst_96 {dimension_numbers = #tpu.dot_dimension_numbers<[1], [0], [0], [1], [0, 0, 1, 1], [], []>} : vector<8x4xbf16>, vector<4x384xbf16>, vector<8x384xf32> -> vector<8x384xf32>
    %c0_97 = arith.constant 0 : index
    %c0_98 = arith.constant 0 : index
    %82 = vector.load %arg11[%c0_97, %c0_98] : memref<8x1xf32, #tpu.memory_space<vmem>>, vector<8x1xf32>
    %83 = vector.broadcast %82 : vector<8x1xf32> to vector<8x384xf32>
    %84 = arith.addf %81, %83 : vector<8x384xf32>
    %cst_99 = arith.constant 0.000000e+00 : f32
    %85 = vector.broadcast %cst_99 : f32 to vector<8x384xf32>
    %86 = arith.maximumf %84, %85 : vector<8x384xf32>
    %87 = vector.broadcast %6 : vector<1x384xf32> to vector<8x384xf32>
    %88 = arith.mulf %86, %87 : vector<8x384xf32>
    %c0_100 = arith.constant 0 : index
    %c128_101 = arith.constant 128 : index
    %89 = vector.load %arg22[%c0_100, %c128_101] : memref<8x640xf32, #tpu.memory_space<vmem>>, vector<8x384xf32>
    tpu.vector_store %arg22[%c0_100, %c128_101], %88 {strides = array<i32>} : memref<8x640xf32, #tpu.memory_space<vmem>>, vector<8x384xf32>,
    %c0_102 = arith.constant 0 : index
    %c109_103 = arith.constant 109 : index
    %90 = vector.load %arg22[%c0_102, %c109_103] : memref<8x640xf32, #tpu.memory_space<vmem>>, vector<8x384xf32>
    %c0_104 = arith.constant 0 : index
    %c0_105 = arith.constant 0 : index
    %91 = vector.load %arg23[%c0_104, %c0_105] : memref<72x384xf32, #tpu.memory_space<vmem>>, vector<8x384xf32>
    tpu.vector_store %arg23[%c0_104, %c0_105], %90 {strides = array<i32>} : memref<72x384xf32, #tpu.memory_space<vmem>>, vector<8x384xf32>,
    %c0_106 = arith.constant 0 : index
    %c110_107 = arith.constant 110 : index
    %92 = vector.load %arg22[%c0_106, %c110_107] : memref<8x640xf32, #tpu.memory_space<vmem>>, vector<8x384xf32>
    %c8_108 = arith.constant 8 : index
    %c0_109 = arith.constant 0 : index
    %93 = vector.load %arg23[%c8_108, %c0_109] : memref<72x384xf32, #tpu.memory_space<vmem>>, vector<8x384xf32>
    tpu.vector_store %arg23[%c8_108, %c0_109], %92 {strides = array<i32>} : memref<72x384xf32, #tpu.memory_space<vmem>>, vector<8x384xf32>,
    %c0_110 = arith.constant 0 : index
    %c111_111 = arith.constant 111 : index
    %94 = vector.load %arg22[%c0_110, %c111_111] : memref<8x640xf32, #tpu.memory_space<vmem>>, vector<8x384xf32>
    %c16_112 = arith.constant 16 : index
    %c0_113 = arith.constant 0 : index
    %95 = vector.load %arg23[%c16_112, %c0_113] : memref<72x384xf32, #tpu.memory_space<vmem>>, vector<8x384xf32>
    tpu.vector_store %arg23[%c16_112, %c0_113], %94 {strides = array<i32>} : memref<72x384xf32, #tpu.memory_space<vmem>>, vector<8x384xf32>,
    %c0_114 = arith.constant 0 : index
    %c127_115 = arith.constant 127 : index
    %96 = vector.load %arg22[%c0_114, %c127_115] : memref<8x640xf32, #tpu.memory_space<vmem>>, vector<8x384xf32>
    %c24_116 = arith.constant 24 : index
    %c0_117 = arith.constant 0 : index
    %97 = vector.load %arg23[%c24_116, %c0_117] : memref<72x384xf32, #tpu.memory_space<vmem>>, vector<8x384xf32>
    tpu.vector_store %arg23[%c24_116, %c0_117], %96 {strides = array<i32>} : memref<72x384xf32, #tpu.memory_space<vmem>>, vector<8x384xf32>,
    %c0_118 = arith.constant 0 : index
    %c128_119 = arith.constant 128 : index
    %98 = vector.load %arg22[%c0_118, %c128_119] : memref<8x640xf32, #tpu.memory_space<vmem>>, vector<8x384xf32>
    %c32_120 = arith.constant 32 : index
    %c0_121 = arith.constant 0 : index
    %99 = vector.load %arg23[%c32_120, %c0_121] : memref<72x384xf32, #tpu.memory_space<vmem>>, vector<8x384xf32>
    tpu.vector_store %arg23[%c32_120, %c0_121], %98 {strides = array<i32>} : memref<72x384xf32, #tpu.memory_space<vmem>>, vector<8x384xf32>,
    %c0_122 = arith.constant 0 : index
    %c129_123 = arith.constant 129 : index
    %100 = vector.load %arg22[%c0_122, %c129_123] : memref<8x640xf32, #tpu.memory_space<vmem>>, vector<8x384xf32>
    %c40_124 = arith.constant 40 : index
    %c0_125 = arith.constant 0 : index
    %101 = vector.load %arg23[%c40_124, %c0_125] : memref<72x384xf32, #tpu.memory_space<vmem>>, vector<8x384xf32>
    tpu.vector_store %arg23[%c40_124, %c0_125], %100 {strides = array<i32>} : memref<72x384xf32, #tpu.memory_space<vmem>>, vector<8x384xf32>,
    %c0_126 = arith.constant 0 : index
    %c145_127 = arith.constant 145 : index
    %102 = vector.load %arg22[%c0_126, %c145_127] : memref<8x640xf32, #tpu.memory_space<vmem>>, vector<8x384xf32>
    %c48_128 = arith.constant 48 : index
    %c0_129 = arith.constant 0 : index
    %103 = vector.load %arg23[%c48_128, %c0_129] : memref<72x384xf32, #tpu.memory_space<vmem>>, vector<8x384xf32>
    tpu.vector_store %arg23[%c48_128, %c0_129], %102 {strides = array<i32>} : memref<72x384xf32, #tpu.memory_space<vmem>>, vector<8x384xf32>,
    %c0_130 = arith.constant 0 : index
    %c146_131 = arith.constant 146 : index
    %104 = vector.load %arg22[%c0_130, %c146_131] : memref<8x640xf32, #tpu.memory_space<vmem>>, vector<8x384xf32>
    %c56_132 = arith.constant 56 : index
    %c0_133 = arith.constant 0 : index
    %105 = vector.load %arg23[%c56_132, %c0_133] : memref<72x384xf32, #tpu.memory_space<vmem>>, vector<8x384xf32>
    tpu.vector_store %arg23[%c56_132, %c0_133], %104 {strides = array<i32>} : memref<72x384xf32, #tpu.memory_space<vmem>>, vector<8x384xf32>,
    %c0_134 = arith.constant 0 : index
    %c147_135 = arith.constant 147 : index
    %106 = vector.load %arg22[%c0_134, %c147_135] : memref<8x640xf32, #tpu.memory_space<vmem>>, vector<8x384xf32>
    %c64_136 = arith.constant 64 : index
    %c0_137 = arith.constant 0 : index
    %107 = vector.load %arg23[%c64_136, %c0_137] : memref<72x384xf32, #tpu.memory_space<vmem>>, vector<8x384xf32>
    tpu.vector_store %arg23[%c64_136, %c0_137], %106 {strides = array<i32>} : memref<72x384xf32, #tpu.memory_space<vmem>>, vector<8x384xf32>,
    %c0_138 = arith.constant 0 : index
    %c0_139 = arith.constant 0 : index
    %108 = vector.load %arg12[%c0_138, %c0_139] : memref<4x72xbf16, #tpu.memory_space<vmem>>, vector<4x72xbf16>
    %c0_140 = arith.constant 0 : index
    %c0_141 = arith.constant 0 : index
    %109 = vector.load %arg23[%c0_140, %c0_141] : memref<72x384xf32, #tpu.memory_space<vmem>>, vector<72x384xf32>
    %110 = arith.truncf %109 : vector<72x384xf32> to vector<72x384xbf16>
    %cst_142 = arith.constant dense<0.000000e+00> : vector<4x384xf32>
    %111 = tpu.matmul %108, %110, %cst_142 {dimension_numbers = #tpu.dot_dimension_numbers<[1], [0], [0], [1], [0, 0, 1, 1], [], []>} : vector<4x72xbf16>, vector<72x384xbf16>, vector<4x384xf32> -> vector<4x384xf32>
    %c0_143 = arith.constant 0 : index
    %c0_144 = arith.constant 0 : index
    %112 = vector.load %arg13[%c0_143, %c0_144] : memref<4x1xf32, #tpu.memory_space<vmem>>, vector<4x1xf32>
    %113 = vector.broadcast %112 : vector<4x1xf32> to vector<4x384xf32>
    %114 = arith.addf %111, %113 : vector<4x384xf32>
    %cst_145 = arith.constant 0.000000e+00 : f32
    %115 = vector.broadcast %cst_145 : f32 to vector<4x384xf32>
    %116 = arith.maximumf %114, %115 : vector<4x384xf32>
    %c0_146 = arith.constant 0 : index
    %c0_147 = arith.constant 0 : index
    %117 = vector.load %arg14[%c0_146, %c0_147] : memref<16x8xbf16, #tpu.memory_space<vmem>>, vector<16x8xbf16>
    %118 = arith.truncf %40 : vector<8x384xf32> to vector<8x384xbf16>
    %cst_148 = arith.constant dense<0.000000e+00> : vector<16x384xf32>
    %119 = tpu.matmul %117, %118, %cst_148 {dimension_numbers = #tpu.dot_dimension_numbers<[1], [0], [0], [1], [0, 0, 1, 1], [], []>} : vector<16x8xbf16>, vector<8x384xbf16>, vector<16x384xf32> -> vector<16x384xf32>
    %c0_149 = arith.constant 0 : index
    %c0_150 = arith.constant 0 : index
    %120 = vector.load %arg15[%c0_149, %c0_150] : memref<16x4xbf16, #tpu.memory_space<vmem>>, vector<16x4xbf16>
    %121 = arith.truncf %78 : vector<4x384xf32> to vector<4x384xbf16>
    %cst_151 = arith.constant dense<0.000000e+00> : vector<16x384xf32>
    %122 = tpu.matmul %120, %121, %cst_151 {dimension_numbers = #tpu.dot_dimension_numbers<[1], [0], [0], [1], [0, 0, 1, 1], [], []>} : vector<16x4xbf16>, vector<4x384xbf16>, vector<16x384xf32> -> vector<16x384xf32>
    %123 = arith.addf %119, %122 : vector<16x384xf32>
    %c0_152 = arith.constant 0 : index
    %c0_153 = arith.constant 0 : index
    %124 = vector.load %arg16[%c0_152, %c0_153] : memref<16x4xbf16, #tpu.memory_space<vmem>>, vector<16x4xbf16>
    %125 = arith.truncf %116 : vector<4x384xf32> to vector<4x384xbf16>
    %cst_154 = arith.constant dense<0.000000e+00> : vector<16x384xf32>
    %126 = tpu.matmul %124, %125, %cst_154 {dimension_numbers = #tpu.dot_dimension_numbers<[1], [0], [0], [1], [0, 0, 1, 1], [], []>} : vector<16x4xbf16>, vector<4x384xbf16>, vector<16x384xf32> -> vector<16x384xf32>
    %127 = arith.addf %123, %126 : vector<16x384xf32>
    %c0_155 = arith.constant 0 : index
    %c0_156 = arith.constant 0 : index
    %128 = vector.load %arg17[%c0_155, %c0_156] : memref<16x8xbf16, #tpu.memory_space<vmem>>, vector<16x8xbf16>
    %c0_157 = arith.constant 0 : index
    %c0_158 = arith.constant 0 : index
    %c0_159 = arith.constant 0 : index
    %129 = vector.load %arg2[%c0_157, %c0_158, %c0_159] : memref<1x8x384xbf16, #tpu.memory_space<vmem>>, vector<1x8x384xbf16>
    %130 = vector.shape_cast %129 : vector<1x8x384xbf16> to vector<8x384xbf16>
    %cst_160 = arith.constant dense<0.000000e+00> : vector<16x384xf32>
    %131 = tpu.matmul %128, %130, %cst_160 {dimension_numbers = #tpu.dot_dimension_numbers<[1], [0], [0], [1], [0, 0, 1, 1], [], []>} : vector<16x8xbf16>, vector<8x384xbf16>, vector<16x384xf32> -> vector<16x384xf32>
    %132 = arith.addf %127, %131 : vector<16x384xf32>
    %c0_161 = arith.constant 0 : index
    %c0_162 = arith.constant 0 : index
    %133 = vector.load %arg18[%c0_161, %c0_162] : memref<16x1xf32, #tpu.memory_space<vmem>>, vector<16x1xf32>
    %134 = vector.broadcast %133 : vector<16x1xf32> to vector<16x384xf32>
    %135 = arith.addf %132, %134 : vector<16x384xf32>
    %cst_163 = arith.constant 0.000000e+00 : f32
    %136 = vector.broadcast %cst_163 : f32 to vector<16x384xf32>
    %137 = arith.maximumf %135, %136 : vector<16x384xf32>
    %c0_164 = arith.constant 0 : index
    %c0_165 = arith.constant 0 : index
    %c0_166 = arith.constant 0 : index
    %138 = vector.load %arg19[%c0_164, %c0_165, %c0_166] : memref<1x16x384xf32, #tpu.memory_space<vmem>>, vector<1x16x384xf32>
    %139 = vector.shape_cast %138 : vector<1x16x384xf32> to vector<16x384xf32>
    %140 = vector.shape_cast %137 : vector<16x384xf32> to vector<1x16x384xf32>
    tpu.vector_store %arg19[%c0_164, %c0_165, %c0_166], %140 {strides = array<i32>} : memref<1x16x384xf32, #tpu.memory_space<vmem>>, vector<1x16x384xf32>,
    return
  }
  func.func @transform_0(%arg0: i32) -> (i32, i32, i32) {
    %c0_i32 = arith.constant 0 : i32
    %c0_i32_0 = arith.constant 0 : i32
    %c0_i32_1 = arith.constant 0 : i32
    return %arg0, %c0_i32, %c0_i32_0 : i32, i32, i32
  }
  func.func @transform_1(%arg0: i32) -> (i32, i32, i32) {
    %c0_i32 = arith.constant 0 : i32
    %c0_i32_0 = arith.constant 0 : i32
    %c0_i32_1 = arith.constant 0 : i32
    return %arg0, %c0_i32, %c0_i32_0 : i32, i32, i32
  }
  func.func @transform_2(%arg0: i32) -> (i32, i32) {
    %c0_i32 = arith.constant 0 : i32
    %c0_i32_0 = arith.constant 0 : i32
    %c0_i32_1 = arith.constant 0 : i32
    return %c0_i32, %c0_i32_0 : i32, i32
  }
  func.func @transform_3(%arg0: i32) -> (i32, i32) {
    %c0_i32 = arith.constant 0 : i32
    %c0_i32_0 = arith.constant 0 : i32
    %c0_i32_1 = arith.constant 0 : i32
    return %c0_i32, %c0_i32_0 : i32, i32
  }
  func.func @transform_4(%arg0: i32) -> (i32, i32) {
    %c0_i32 = arith.constant 0 : i32
    %c0_i32_0 = arith.constant 0 : i32
    %c0_i32_1 = arith.constant 0 : i32
    return %c0_i32, %c0_i32_0 : i32, i32
  }
  func.func @transform_5(%arg0: i32) -> (i32, i32) {
    %c0_i32 = arith.constant 0 : i32
    %c0_i32_0 = arith.constant 0 : i32
    %c0_i32_1 = arith.constant 0 : i32
    return %c0_i32, %c0_i32_0 : i32, i32
  }
  func.func @transform_6(%arg0: i32) -> (i32, i32) {
    %c0_i32 = arith.constant 0 : i32
    %c0_i32_0 = arith.constant 0 : i32
    %c0_i32_1 = arith.constant 0 : i32
    return %c0_i32, %c0_i32_0 : i32, i32
  }
  func.func @transform_7(%arg0: i32) -> (i32, i32) {
    %c0_i32 = arith.constant 0 : i32
    %c0_i32_0 = arith.constant 0 : i32
    %c0_i32_1 = arith.constant 0 : i32
    return %c0_i32, %c0_i32_0 : i32, i32
  }
  func.func @transform_8(%arg0: i32) -> (i32, i32) {
    %c0_i32 = arith.constant 0 : i32
    %c0_i32_0 = arith.constant 0 : i32
    %c0_i32_1 = arith.constant 0 : i32
    return %c0_i32, %c0_i32_0 : i32, i32
  }
  func.func @transform_9(%arg0: i32) -> (i32, i32) {
    %c0_i32 = arith.constant 0 : i32
    %c0_i32_0 = arith.constant 0 : i32
    %c0_i32_1 = arith.constant 0 : i32
    return %c0_i32, %c0_i32_0 : i32, i32
  }
  func.func @transform_10(%arg0: i32) -> (i32, i32) {
    %c0_i32 = arith.constant 0 : i32
    %c0_i32_0 = arith.constant 0 : i32
    %c0_i32_1 = arith.constant 0 : i32
    return %c0_i32, %c0_i32_0 : i32, i32
  }
  func.func @transform_11(%arg0: i32) -> (i32, i32) {
    %c0_i32 = arith.constant 0 : i32
    %c0_i32_0 = arith.constant 0 : i32
    %c0_i32_1 = arith.constant 0 : i32
    return %c0_i32, %c0_i32_0 : i32, i32
  }
  func.func @transform_12(%arg0: i32) -> (i32, i32) {
    %c0_i32 = arith.constant 0 : i32
    %c0_i32_0 = arith.constant 0 : i32
    %c0_i32_1 = arith.constant 0 : i32
    return %c0_i32, %c0_i32_0 : i32, i32
  }
  func.func @transform_13(%arg0: i32) -> (i32, i32) {
    %c0_i32 = arith.constant 0 : i32
    %c0_i32_0 = arith.constant 0 : i32
    %c0_i32_1 = arith.constant 0 : i32
    return %c0_i32, %c0_i32_0 : i32, i32
  }
  func.func @transform_14(%arg0: i32) -> (i32, i32) {
    %c0_i32 = arith.constant 0 : i32
    %c0_i32_0 = arith.constant 0 : i32
    %c0_i32_1 = arith.constant 0 : i32
    return %c0_i32, %c0_i32_0 : i32, i32
  }
  func.func @transform_15(%arg0: i32) -> (i32, i32) {
    %c0_i32 = arith.constant 0 : i32
    %c0_i32_0 = arith.constant 0 : i32
    %c0_i32_1 = arith.constant 0 : i32
    return %c0_i32, %c0_i32_0 : i32, i32
  }
  func.func @transform_16(%arg0: i32) -> (i32, i32) {
    %c0_i32 = arith.constant 0 : i32
    %c0_i32_0 = arith.constant 0 : i32
    %c0_i32_1 = arith.constant 0 : i32
    return %c0_i32, %c0_i32_0 : i32, i32
  }
  func.func @transform_17(%arg0: i32) -> (i32, i32) {
    %c0_i32 = arith.constant 0 : i32
    %c0_i32_0 = arith.constant 0 : i32
    %c0_i32_1 = arith.constant 0 : i32
    return %c0_i32, %c0_i32_0 : i32, i32
  }
  func.func @transform_18(%arg0: i32) -> (i32, i32, i32) {
    %c0_i32 = arith.constant 0 : i32
    %c0_i32_0 = arith.constant 0 : i32
    %c0_i32_1 = arith.constant 0 : i32
    return %arg0, %c0_i32, %c0_i32_0 : i32, i32, i32
  }
}

</mosaic_0001>

<llo_original>
// kernel: _selecsls_forward.1
$region0: #{_selecsls_forward.1}
  #allocation0 [shape = 'u32[]', space=smem, size = 0x4, offset = 0x4, fixed_abs, tag = 'smem constant byte address 0x4 - core index']
  #allocation1 [shape = 'u32[144,128]{1,0:T(1,128)}', space=vmem, size = 0x12000, scoped, tag = 'internal scratch']
  #allocation2 [shape = 'f32[4,640]{1,0:T(4,128)}', space=vmem, size = 0x2800, scoped, tag = 'scratch operand']
  #allocation3 [shape = 'f32[8,640]{1,0:T(8,128)}', space=vmem, size = 0x5000, scoped, tag = 'scratch operand']
  #allocation4 [shape = 'f32[8,640]{1,0:T(8,128)}', space=vmem, size = 0x5000, scoped, tag = 'scratch operand']
  #allocation5 [shape = 'f32[72,384]{1,0:T(8,128)}', space=vmem, size = 0x1b000, scoped, tag = 'scratch operand']
  %s0 = inlined_call_operand.vmem [shape: bf16[2,4,384], index: 0, kind: input, shape index: {}]
  %s1 = inlined_call_operand.vmem [shape: bf16[2,8,384], index: 1, kind: input, shape index: {}]
  %s2 = inlined_call_operand.vmem [shape: f32[1,384], index: 2, kind: input, shape index: {}]
  %s3 = inlined_call_operand.vmem [shape: bf16[8,36], index: 3, kind: input, shape index: {}]
  %s4 = inlined_call_operand.vmem [shape: f32[8,1], index: 4, kind: input, shape index: {}]
  %s5 = inlined_call_operand.vmem [shape: bf16[8,8], index: 5, kind: input, shape index: {}]
  %s6 = inlined_call_operand.vmem [shape: f32[8,1], index: 6, kind: input, shape index: {}]
  %s7 = inlined_call_operand.vmem [shape: bf16[4,72], index: 7, kind: input, shape index: {}]
  %s8 = inlined_call_operand.vmem [shape: f32[4,1], index: 8, kind: input, shape index: {}]
  %s9 = inlined_call_operand.vmem [shape: bf16[8,4], index: 9, kind: input, shape index: {}]
  %s10 = inlined_call_operand.vmem [shape: f32[8,1], index: 10, kind: input, shape index: {}]
  %s11 = inlined_call_operand.vmem [shape: bf16[4,72], index: 11, kind: input, shape index: {}]
  %s12 = inlined_call_operand.vmem [shape: f32[4,1], index: 12, kind: input, shape index: {}]
  %s13 = inlined_call_operand.vmem [shape: bf16[16,8], index: 13, kind: input, shape index: {}]
  %s14 = inlined_call_operand.vmem [shape: bf16[16,4], index: 14, kind: input, shape index: {}]
  %s15 = inlined_call_operand.vmem [shape: bf16[16,4], index: 15, kind: input, shape index: {}]
  %s16 = inlined_call_operand.vmem [shape: bf16[16,8], index: 16, kind: input, shape index: {}]
  %s17 = inlined_call_operand.vmem [shape: f32[16,1], index: 17, kind: input, shape index: {}]
  %s18 = inlined_call_operand.vmem [shape: f32[2,16,384], index: 18, kind: output, shape index: {}]
  %s19 = sld [smem:[#allocation0]]
  $region105: #{_selecsls_forward.1} parent=0
    _
  %s21 = ssub.s32 1, %s19
  %s22 = scalar_select 0, %s21, %s19
  loop: start=0, step=1, limit=4
  $region2: #{_selecsls_forward.1} parent=0 // loop_pre_header
    _
  $region3: #{_selecsls_forward.1} parent=0 // loop_header
    %s24 = sphi 0, %s28
    %p25 = scmp.ge.s32.totalorder %s24, 4
    %s34 = sphi 0, %s36
    %s37 = sphi 0, %s34
    %s38 = sphi 0, %s37
    %s54 = sphi 0, %s38
    %s60 = sphi 0, %s62
    %s63 = sphi 0, %s60
    %s64 = sphi 0, %s63
    %s80 = sphi 0, %s64
    %s84 = sphi 0, %s84
    %s86 = sphi 0, %s84
    %s87 = sphi 0, %s86
    %s101 = sphi 0, %s87
    %s105 = sphi 0, %s105
    %s107 = sphi 0, %s105
    %s108 = sphi 0, %s107
    %s122 = sphi 0, %s108
    %s126 = sphi 0, %s126
    %s128 = sphi 0, %s126
    %s129 = sphi 0, %s128
    %s143 = sphi 0, %s129
    %s147 = sphi 0, %s147
    %s149 = sphi 0, %s147
    %s150 = sphi 0, %s149
    %s164 = sphi 0, %s150
    %s168 = sphi 0, %s168
    %s170 = sphi 0, %s168
    %s171 = sphi 0, %s170
    %s185 = sphi 0, %s171
    %s189 = sphi 0, %s189
    %s191 = sphi 0, %s189
    %s192 = sphi 0, %s191
    %s206 = sphi 0, %s192
    %s210 = sphi 0, %s210
    %s212 = sphi 0, %s210
    %s213 = sphi 0, %s212
    %s227 = sphi 0, %s213
    %s231 = sphi 0, %s231
    %s233 = sphi 0, %s231
    %s234 = sphi 0, %s233
    %s248 = sphi 0, %s234
    %s252 = sphi 0, %s252
    %s254 = sphi 0, %s252
    %s255 = sphi 0, %s254
    %s269 = sphi 0, %s255
    %s273 = sphi 0, %s273
    %s275 = sphi 0, %s273
    %s276 = sphi 0, %s275
    %s290 = sphi 0, %s276
    %s294 = sphi 0, %s294
    %s296 = sphi 0, %s294
    %s297 = sphi 0, %s296
    %s311 = sphi 0, %s297
    %s315 = sphi 0, %s315
    %s317 = sphi 0, %s315
    %s318 = sphi 0, %s317
    %s332 = sphi 0, %s318
    %s336 = sphi 0, %s336
    %s338 = sphi 0, %s336
    %s339 = sphi 0, %s338
    %s353 = sphi 0, %s339
    %s357 = sphi 0, %s357
    %s359 = sphi 0, %s357
    %s360 = sphi 0, %s359
    %s374 = sphi 0, %s360
    %s378 = sphi 0, %s378
    %s380 = sphi 0, %s378
    %s381 = sphi 0, %s380
    %s395 = sphi 0, %s381
    %s399 = sphi 0, %s399
    %s401 = sphi 0, %s399
    %s402 = sphi 0, %s401
    %s416 = sphi 0, %s402
    %s422 = sphi 0, %s424
    %s425 = sphi 0, %s422
    %s426 = sphi 0, %s425
    %s442 = sphi 0, %s426
  $region4: #{_selecsls_forward.1} parent=0 // loop_header_branch
    %27 = sbr.rel (%p25) target = $region8
  $region5: #{_selecsls_forward.1} parent=0 // loop_body
    %s29 = ssub.s32 %s24, 1
    %s30 = ssub.s32 %s24, 2
    %s31 = sadd.s32 %s24, 1
    %s32 = ssub.s32 %s24, %s31
    %p33 = scmp.eq.s32.totalorder %s32, 0
    %s35 = sadd.s32 %s34, 1
    %s36 = scalar_select %p33, %s34, %s35
    %p39 = pneg %p33
    %p40 = scmp.eq.s32.totalorder %s24, 1
    %p41 = por %p39, %p40
    %p42 = scmp.ne.s32.totalorder %s34, %s37
    %p43 = scmp.eq.s32.totalorder %s24, 0
    %p44 = por %p42, %p43
    %p45 = scmp.ne.s32.totalorder %s34, %s37
    %p46 = scmp.eq.s32.totalorder %s29, 1
    %p47 = por %p45, %p46
    %p48 = scmp.ne.s32.totalorder %s37, %s38
    %p49 = scmp.eq.s32.totalorder %s29, 0
    %p50 = por %p48, %p49
    %p51 = scmp.ne.s32.totalorder %s37, %s38
    %p52 = scmp.eq.s32.totalorder %s30, 1
    %p53 = por %p51, %p52
    %p55 = scmp.ne.s32.totalorder %s38, %s54
    %p56 = scmp.eq.s32.totalorder %s30, 0
    %p57 = por %p55, %p56
    %s58 = ssub.s32 %s24, %s31
    %p59 = scmp.eq.s32.totalorder %s58, 0
    %s61 = sadd.s32 %s60, 1
    %s62 = scalar_select %p59, %s60, %s61
    %p65 = pneg %p59
    %p66 = scmp.eq.s32.totalorder %s24, 1
    %p67 = por %p65, %p66
    %p68 = scmp.ne.s32.totalorder %s60, %s63
    %p69 = scmp.eq.s32.totalorder %s24, 0
    %p70 = por %p68, %p69
    %p71 = scmp.ne.s32.totalorder %s60, %s63
    %p72 = scmp.eq.s32.totalorder %s29, 1
    %p73 = por %p71, %p72
    %p74 = scmp.ne.s32.totalorder %s63, %s64
    %p75 = scmp.eq.s32.totalorder %s29, 0
    %p76 = por %p74, %p75
    %p77 = scmp.ne.s32.totalorder %s63, %s64
    %p78 = scmp.eq.s32.totalorder %s30, 1
    %p79 = por %p77, %p78
    %p81 = scmp.ne.s32.totalorder %s64, %s80
    %p82 = scmp.eq.s32.totalorder %s30, 0
    %p83 = por %p81, %p82
    %s85 = sadd.s32 %s84, 1
    %p88 = scmp.eq.s32.totalorder %s24, 1
    %p89 = scmp.ne.s32.totalorder %s84, %s86
    %p90 = scmp.eq.s32.totalorder %s24, 0
    %p91 = por %p89, %p90
    %p92 = scmp.ne.s32.totalorder %s84, %s86
    %p93 = scmp.eq.s32.totalorder %s29, 1
    %p94 = por %p92, %p93
    %p95 = scmp.ne.s32.totalorder %s86, %s87
    %p96 = scmp.eq.s32.totalorder %s29, 0
    %p97 = por %p95, %p96
    %p98 = scmp.ne.s32.totalorder %s86, %s87
    %p99 = scmp.eq.s32.totalorder %s30, 1
    %p100 = por %p98, %p99
    %p102 = scmp.ne.s32.totalorder %s87, %s101
    %p103 = scmp.eq.s32.totalorder %s30, 0
    %p104 = por %p102, %p103
    %s106 = sadd.s32 %s105, 1
    %p109 = scmp.eq.s32.totalorder %s24, 1
    %p110 = scmp.ne.s32.totalorder %s105, %s107
    %p111 = scmp.eq.s32.totalorder %s24, 0
    %p112 = por %p110, %p111
    %p113 = scmp.ne.s32.totalorder %s105, %s107
    %p114 = scmp.eq.s32.totalorder %s29, 1
    %p115 = por %p113, %p114
    %p116 = scmp.ne.s32.totalorder %s107, %s108
    %p117 = scmp.eq.s32.totalorder %s29, 0
    %p118 = por %p116, %p117
    %p119 = scmp.ne.s32.totalorder %s107, %s108
    %p120 = scmp.eq.s32.totalorder %s30, 1
    %p121 = por %p119, %p120
    %p123 = scmp.ne.s32.totalorder %s108, %s122
    %p124 = scmp.eq.s32.totalorder %s30, 0
    %p125 = por %p123, %p124
    %s127 = sadd.s32 %s126, 1
    %p130 = scmp.eq.s32.totalorder %s24, 1
    %p131 = scmp.ne.s32.totalorder %s126, %s128
    %p132 = scmp.eq.s32.totalorder %s24, 0
    %p133 = por %p131, %p132
    %p134 = scmp.ne.s32.totalorder %s126, %s128
    %p135 = scmp.eq.s32.totalorder %s29, 1
    %p136 = por %p134, %p135
    %p137 = scmp.ne.s32.totalorder %s128, %s129
    %p138 = scmp.eq.s32.totalorder %s29, 0
    %p139 = por %p137, %p138
    %p140 = scmp.ne.s32.totalorder %s128, %s129
    %p141 = scmp.eq.s32.totalorder %s30, 1
    %p142 = por %p140, %p141
    %p144 = scmp.ne.s32.totalorder %s129, %s143
    %p145 = scmp.eq.s32.totalorder %s30, 0
    %p146 = por %p144, %p145
    %s148 = sadd.s32 %s147, 1
    %p151 = scmp.eq.s32.totalorder %s24, 1
    %p152 = scmp.ne.s32.totalorder %s147, %s149
    %p153 = scmp.eq.s32.totalorder %s24, 0
    %p154 = por %p152, %p153
    %p155 = scmp.ne.s32.totalorder %s147, %s149
    %p156 = scmp.eq.s32.totalorder %s29, 1
    %p157 = por %p155, %p156
    %p158 = scmp.ne.s32.totalorder %s149, %s150
    %p159 = scmp.eq.s32.totalorder %s29, 0
    %p160 = por %p158, %p159
    %p161 = scmp.ne.s32.totalorder %s149, %s150
    %p162 = scmp.eq.s32.totalorder %s30, 1
    %p163 = por %p161, %p162
    %p165 = scmp.ne.s32.totalorder %s150, %s164
    %p166 = scmp.eq.s32.totalorder %s30, 0
    %p167 = por %p165, %p166
    %s169 = sadd.s32 %s168, 1
    %p172 = scmp.eq.s32.totalorder %s24, 1
    %p173 = scmp.ne.s32.totalorder %s168, %s170
    %p174 = scmp.eq.s32.totalorder %s24, 0
    %p175 = por %p173, %p174
    %p176 = scmp.ne.s32.totalorder %s168, %s170
    %p177 = scmp.eq.s32.totalorder %s29, 1
    %p178 = por %p176, %p177
    %p179 = scmp.ne.s32.totalorder %s170, %s171
    %p180 = scmp.eq.s32.totalorder %s29, 0
    %p181 = por %p179, %p180
    %p182 = scmp.ne.s32.totalorder %s170, %s171
    %p183 = scmp.eq.s32.totalorder %s30, 1
    %p184 = por %p182, %p183
    %p186 = scmp.ne.s32.totalorder %s171, %s185
    %p187 = scmp.eq.s32.totalorder %s30, 0
    %p188 = por %p186, %p187
    %s190 = sadd.s32 %s189, 1
    %p193 = scmp.eq.s32.totalorder %s24, 1
    %p194 = scmp.ne.s32.totalorder %s189, %s191
    %p195 = scmp.eq.s32.totalorder %s24, 0
    %p196 = por %p194, %p195
    %p197 = scmp.ne.s32.totalorder %s189, %s191
    %p198 = scmp.eq.s32.totalorder %s29, 1
    %p199 = por %p197, %p198
    %p200 = scmp.ne.s32.totalorder %s191, %s192
    %p201 = scmp.eq.s32.totalorder %s29, 0
    %p202 = por %p200, %p201
    %p203 = scmp.ne.s32.totalorder %s191, %s192
    %p204 = scmp.eq.s32.totalorder %s30, 1
    %p205 = por %p203, %p204
    %p207 = scmp.ne.s32.totalorder %s192, %s206
    %p208 = scmp.eq.s32.totalorder %s30, 0
    %p209 = por %p207, %p208
    %s211 = sadd.s32 %s210, 1
    %p214 = scmp.eq.s32.totalorder %s24, 1
    %p215 = scmp.ne.s32.totalorder %s210, %s212
    %p216 = scmp.eq.s32.totalorder %s24, 0
    %p217 = por %p215, %p216
    %p218 = scmp.ne.s32.totalorder %s210, %s212
    %p219 = scmp.eq.s32.totalorder %s29, 1
    %p220 = por %p218, %p219
    %p221 = scmp.ne.s32.totalorder %s212, %s213
    %p222 = scmp.eq.s32.totalorder %s29, 0
    %p223 = por %p221, %p222
    %p224 = scmp.ne.s32.totalorder %s212, %s213
    %p225 = scmp.eq.s32.totalorder %s30, 1
    %p226 = por %p224, %p225
    %p228 = scmp.ne.s32.totalorder %s213, %s227
    %p229 = scmp.eq.s32.totalorder %s30, 0
    %p230 = por %p228, %p229
    %s232 = sadd.s32 %s231, 1
    %p235 = scmp.eq.s32.totalorder %s24, 1
    %p236 = scmp.ne.s32.totalorder %s231, %s233
    %p237 = scmp.eq.s32.totalorder %s24, 0
    %p238 = por %p236, %p237
    %p239 = scmp.ne.s32.totalorder %s231, %s233
    %p240 = scmp.eq.s32.totalorder %s29, 1
    %p241 = por %p239, %p240
    %p242 = scmp.ne.s32.totalorder %s233, %s234
    %p243 = scmp.eq.s32.totalorder %s29, 0
    %p244 = por %p242, %p243
    %p245 = scmp.ne.s32.totalorder %s233, %s234
    %p246 = scmp.eq.s32.totalorder %s30, 1
    %p247 = por %p245, %p246
    %p249 = scmp.ne.s32.totalorder %s234, %s248
    %p250 = scmp.eq.s32.totalorder %s30, 0
    %p251 = por %p249, %p250
    %s253 = sadd.s32 %s252, 1
    %p256 = scmp.eq.s32.totalorder %s24, 1
    %p257 = scmp.ne.s32.totalorder %s252, %s254
    %p258 = scmp.eq.s32.totalorder %s24, 0
    %p259 = por %p257, %p258
    %p260 = scmp.ne.s32.totalorder %s252, %s254
    %p261 = scmp.eq.s32.totalorder %s29, 1
    %p262 = por %p260, %p261
    %p263 = scmp.ne.s32.totalorder %s254, %s255
    %p264 = scmp.eq.s32.totalorder %s29, 0
    %p265 = por %p263, %p264
    %p266 = scmp.ne.s32.totalorder %s254, %s255
    %p267 = scmp.eq.s32.totalorder %s30, 1
    %p268 = por %p266, %p267
    %p270 = scmp.ne.s32.totalorder %s255, %s269
    %p271 = scmp.eq.s32.totalorder %s30, 0
    %p272 = por %p270, %p271
    %s274 = sadd.s32 %s273, 1
    %p277 = scmp.eq.s32.totalorder %s24, 1
    %p278 = scmp.ne.s32.totalorder %s273, %s275
    %p279 = scmp.eq.s32.totalorder %s24, 0
    %p280 = por %p278, %p279
    %p281 = scmp.ne.s32.totalorder %s273, %s275
    %p282 = scmp.eq.s32.totalorder %s29, 1
    %p283 = por %p281, %p282
    %p284 = scmp.ne.s32.totalorder %s275, %s276
    %p285 = scmp.eq.s32.totalorder %s29, 0
    %p286 = por %p284, %p285
    %p287 = scmp.ne.s32.totalorder %s275, %s276
    %p288 = scmp.eq.s32.totalorder %s30, 1
    %p289 = por %p287, %p288
    %p291 = scmp.ne.s32.totalorder %s276, %s290
    %p292 = scmp.eq.s32.totalorder %s30, 0
    %p293 = por %p291, %p292
    %s295 = sadd.s32 %s294, 1
    %p298 = scmp.eq.s32.totalorder %s24, 1
    %p299 = scmp.ne.s32.totalorder %s294, %s296
    %p300 = scmp.eq.s32.totalorder %s24, 0
    %p301 = por %p299, %p300
    %p302 = scmp.ne.s32.totalorder %s294, %s296
    %p303 = scmp.eq.s32.totalorder %s29, 1
    %p304 = por %p302, %p303
    %p305 = scmp.ne.s32.totalorder %s296, %s297
    %p306 = scmp.eq.s32.totalorder %s29, 0
    %p307 = por %p305, %p306
    %p308 = scmp.ne.s32.totalorder %s296, %s297
    %p309 = scmp.eq.s32.totalorder %s30, 1
    %p310 = por %p308, %p309
    %p312 = scmp.ne.s32.totalorder %s297, %s311
    %p313 = scmp.eq.s32.totalorder %s30, 0
    %p314 = por %p312, %p313
    %s316 = sadd.s32 %s315, 1
    %p319 = scmp.eq.s32.totalorder %s24, 1
    %p320 = scmp.ne.s32.totalorder %s315, %s317
    %p321 = scmp.eq.s32.totalorder %s24, 0
    %p322 = por %p320, %p321
    %p323 = scmp.ne.s32.totalorder %s315, %s317
    %p324 = scmp.eq.s32.totalorder %s29, 1
    %p325 = por %p323, %p324
    %p326 = scmp.ne.s32.totalorder %s317, %s318
    %p327 = scmp.eq.s32.totalorder %s29, 0
    %p328 = por %p326, %p327
    %p329 = scmp.ne.s32.totalorder %s317, %s318
    %p330 = scmp.eq.s32.totalorder %s30, 1
    %p331 = por %p329, %p330
    %p333 = scmp.ne.s32.totalorder %s318, %s332
    %p334 = scmp.eq.s32.totalorder %s30, 0
    %p335 = por %p333, %p334
    %s337 = sadd.s32 %s336, 1
    %p340 = scmp.eq.s32.totalorder %s24, 1
    %p341 = scmp.ne.s32.totalorder %s336, %s338
    %p342 = scmp.eq.s32.totalorder %s24, 0
    %p343 = por %p341, %p342
    %p344 = scmp.ne.s32.totalorder %s336, %s338
    %p345 = scmp.eq.s32.totalorder %s29, 1
    %p346 = por %p344, %p345
    %p347 = scmp.ne.s32.totalorder %s338, %s339
    %p348 = scmp.eq.s32.totalorder %s29, 0
    %p349 = por %p347, %p348
    %p350 = scmp.ne.s32.totalorder %s338, %s339
    %p351 = scmp.eq.s32.totalorder %s30, 1
    %p352 = por %p350, %p351
    %p354 = scmp.ne.s32.totalorder %s339, %s353
    %p355 = scmp.eq.s32.totalorder %s30, 0
    %p356 = por %p354, %p355
    %s358 = sadd.s32 %s357, 1
    %p361 = scmp.eq.s32.totalorder %s24, 1
    %p362 = scmp.ne.s32.totalorder %s357, %s359
    %p363 = scmp.eq.s32.totalorder %s24, 0
    %p364 = por %p362, %p363
    %p365 = scmp.ne.s32.totalorder %s357, %s359
    %p366 = scmp.eq.s32.totalorder %s29, 1
    %p367 = por %p365, %p366
    %p368 = scmp.ne.s32.totalorder %s359, %s360
    %p369 = scmp.eq.s32.totalorder %s29, 0
    %p370 = por %p368, %p369
    %p371 = scmp.ne.s32.totalorder %s359, %s360
    %p372 = scmp.eq.s32.totalorder %s30, 1
    %p373 = por %p371, %p372
    %p375 = scmp.ne.s32.totalorder %s360, %s374
    %p376 = scmp.eq.s32.totalorder %s30, 0
    %p377 = por %p375, %p376
    %s379 = sadd.s32 %s378, 1
    %p382 = scmp.eq.s32.totalorder %s24, 1
    %p383 = scmp.ne.s32.totalorder %s378, %s380
    %p384 = scmp.eq.s32.totalorder %s24, 0
    %p385 = por %p383, %p384
    %p386 = scmp.ne.s32.totalorder %s378, %s380
    %p387 = scmp.eq.s32.totalorder %s29, 1
    %p388 = por %p386, %p387
    %p389 = scmp.ne.s32.totalorder %s380, %s381
    %p390 = scmp.eq.s32.totalorder %s29, 0
    %p391 = por %p389, %p390
    %p392 = scmp.ne.s32.totalorder %s380, %s381
    %p393 = scmp.eq.s32.totalorder %s30, 1
    %p394 = por %p392, %p393
    %p396 = scmp.ne.s32.totalorder %s381, %s395
    %p397 = scmp.eq.s32.totalorder %s30, 0
    %p398 = por %p396, %p397
    %s400 = sadd.s32 %s399, 1
    %p403 = scmp.eq.s32.totalorder %s24, 1
    %p404 = scmp.ne.s32.totalorder %s399, %s401
    %p405 = scmp.eq.s32.totalorder %s24, 0
    %p406 = por %p404, %p405
    %p407 = scmp.ne.s32.totalorder %s399, %s401
    %p408 = scmp.eq.s32.totalorder %s29, 1
    %p409 = por %p407, %p408
    %p410 = scmp.ne.s32.totalorder %s401, %s402
    %p411 = scmp.eq.s32.totalorder %s29, 0
    %p412 = por %p410, %p411
    %p413 = scmp.ne.s32.totalorder %s401, %s402
    %p414 = scmp.eq.s32.totalorder %s30, 1
    %p415 = por %p413, %p414
    %p417 = scmp.ne.s32.totalorder %s402, %s416
    %p418 = scmp.eq.s32.totalorder %s30, 0
    %p419 = por %p417, %p418
    %s420 = ssub.s32 %s24, %s31
    %p421 = scmp.eq.s32.totalorder %s420, 0
    %s423 = sadd.s32 %s422, 1
    %s424 = scalar_select %p421, %s422, %s423
    %p427 = pneg %p421
    %p428 = scmp.eq.s32.totalorder %s24, 1
    %p429 = por %p427, %p428
    %p430 = scmp.ne.s32.totalorder %s422, %s425
    %p431 = scmp.eq.s32.totalorder %s24, 0
    %p432 = por %p430, %p431
    %p433 = scmp.ne.s32.totalorder %s422, %s425
    %p434 = scmp.eq.s32.totalorder %s29, 1
    %p435 = por %p433, %p434
    %p436 = scmp.ne.s32.totalorder %s425, %s426
    %p437 = scmp.eq.s32.totalorder %s29, 0
    %p438 = por %p436, %p437
    %p439 = scmp.ne.s32.totalorder %s425, %s426
    %p440 = scmp.eq.s32.totalorder %s30, 1
    %p441 = por %p439, %p440
    %p443 = scmp.ne.s32.totalorder %s426, %s442
    %p444 = scmp.eq.s32.totalorder %s30, 0
    %p445 = por %p443, %p444
    %p446 = scmp.le.s32.totalorder 1, %s24
    %p447 = scmp.lt.s32.totalorder %s24, 3
    %p448 = pnand %p446, %p447
    %p449 = pneg %p448
    // Predicated region
    $region9: #{_selecsls_forward.1} parent=5 // pred_check
      _
    $region10: #{_selecsls_forward.1} parent=5 // pred_check_branch
      %451 = sbr.rel (%p448) target = $region12
    $region11: #{_selecsls_forward.1} parent=5 // pred_region
      %s452 = ssub.s32 %s24, 1
      // Predicated region
      $region13: #{_selecsls_forward.1} parent=11 // pred_check
        %p453 = pneg %p97
      $region14: #{_selecsls_forward.1} parent=11 // pred_check_branch
        %455 = sbr.rel (%p453) target = $region16
      $region15: #{_selecsls_forward.1} parent=11 // pred_region
        _
      $region16: #{_selecsls_forward.1} parent=11 // pred_fallthru
        _
      // Predicated region
      $region17: #{_selecsls_forward.1} parent=11 // pred_check
        %p456 = pneg %p118
      $region18: #{_selecsls_forward.1} parent=11 // pred_check_branch
        %458 = sbr.rel (%p456) target = $region20
      $region19: #{_selecsls_forward.1} parent=11 // pred_region
        _
      $region20: #{_selecsls_forward.1} parent=11 // pred_fallthru
        _
      // Predicated region
      $region21: #{_selecsls_forward.1} parent=11 // pred_check
        %p459 = pneg %p139
      $region22: #{_selecsls_forward.1} parent=11 // pred_check_branch
        %461 = sbr.rel (%p459) target = $region24
      $region23: #{_selecsls_forward.1} parent=11 // pred_region
        _
      $region24: #{_selecsls_forward.1} parent=11 // pred_fallthru
        _
      // Predicated region
      $region25: #{_selecsls_forward.1} parent=11 // pred_check
        %p462 = pneg %p160
      $region26: #{_selecsls_forward.1} parent=11 // pred_check_branch
        %464 = sbr.rel (%p462) target = $region28
      $region27: #{_selecsls_forward.1} parent=11 // pred_region
        _
      $region28: #{_selecsls_forward.1} parent=11 // pred_fallthru
        _
      // Predicated region
      $region29: #{_selecsls_forward.1} parent=11 // pred_check
        %p465 = pneg %p181
      $region30: #{_selecsls_forward.1} parent=11 // pred_check_branch
        %467 = sbr.rel (%p465) target = $region32
      $region31: #{_selecsls_forward.1} parent=11 // pred_region
        _
      $region32: #{_selecsls_forward.1} parent=11 // pred_fallthru
        _
      // Predicated region
      $region33: #{_selecsls_forward.1} parent=11 // pred_check
        %p468 = pneg %p202
      $region34: #{_selecsls_forward.1} parent=11 // pred_check_branch
        %470 = sbr.rel (%p468) target = $region36
      $region35: #{_selecsls_forward.1} parent=11 // pred_region
        _
      $region36: #{_selecsls_forward.1} parent=11 // pred_fallthru
        _
      // Predicated region
      $region37: #{_selecsls_forward.1} parent=11 // pred_check
        %p471 = pneg %p223
      $region38: #{_selecsls_forward.1} parent=11 // pred_check_branch
        %473 = sbr.rel (%p471) target = $region40
      $region39: #{_selecsls_forward.1} parent=11 // pred_region
        _
      $region40: #{_selecsls_forward.1} parent=11 // pred_fallthru
        _
      // Predicated region
      $region41: #{_selecsls_forward.1} parent=11 // pred_check
        %p474 = pneg %p244
      $region42: #{_selecsls_forward.1} parent=11 // pred_check_branch
        %476 = sbr.rel (%p474) target = $region44
      $region43: #{_selecsls_forward.1} parent=11 // pred_region
        _
      $region44: #{_selecsls_forward.1} parent=11 // pred_fallthru
        _
      // Predicated region
      $region45: #{_selecsls_forward.1} parent=11 // pred_check
        %p477 = pneg %p265
      $region46: #{_selecsls_forward.1} parent=11 // pred_check_branch
        %479 = sbr.rel (%p477) target = $region48
      $region47: #{_selecsls_forward.1} parent=11 // pred_region
        _
      $region48: #{_selecsls_forward.1} parent=11 // pred_fallthru
        _
      // Predicated region
      $region49: #{_selecsls_forward.1} parent=11 // pred_check
        %p480 = pneg %p286
      $region50: #{_selecsls_forward.1} parent=11 // pred_check_branch
        %482 = sbr.rel (%p480) target = $region52
      $region51: #{_selecsls_forward.1} parent=11 // pred_region
        _
      $region52: #{_selecsls_forward.1} parent=11 // pred_fallthru
        _
      // Predicated region
      $region53: #{_selecsls_forward.1} parent=11 // pred_check
        %p483 = pneg %p307
      $region54: #{_selecsls_forward.1} parent=11 // pred_check_branch
        %485 = sbr.rel (%p483) target = $region56
      $region55: #{_selecsls_forward.1} parent=11 // pred_region
        _
      $region56: #{_selecsls_forward.1} parent=11 // pred_fallthru
        _
      // Predicated region
      $region57: #{_selecsls_forward.1} parent=11 // pred_check
        %p486 = pneg %p328
      $region58: #{_selecsls_forward.1} parent=11 // pred_check_branch
        %488 = sbr.rel (%p486) target = $region60
      $region59: #{_selecsls_forward.1} parent=11 // pred_region
        _
      $region60: #{_selecsls_forward.1} parent=11 // pred_fallthru
        _
      // Predicated region
      $region61: #{_selecsls_forward.1} parent=11 // pred_check
        %p489 = pneg %p349
      $region62: #{_selecsls_forward.1} parent=11 // pred_check_branch
        %491 = sbr.rel (%p489) target = $region64
      $region63: #{_selecsls_forward.1} parent=11 // pred_region
        _
      $region64: #{_selecsls_forward.1} parent=11 // pred_fallthru
        _
      // Predicated region
      $region65: #{_selecsls_forward.1} parent=11 // pred_check
        %p492 = pneg %p370
      $region66: #{_selecsls_forward.1} parent=11 // pred_check_branch
        %494 = sbr.rel (%p492) target = $region68
      $region67: #{_selecsls_forward.1} parent=11 // pred_region
        _
      $region68: #{_selecsls_forward.1} parent=11 // pred_fallthru
        _
      // Predicated region
      $region69: #{_selecsls_forward.1} parent=11 // pred_check
        %p495 = pneg %p391
      $region70: #{_selecsls_forward.1} parent=11 // pred_check_branch
        %497 = sbr.rel (%p495) target = $region72
      $region71: #{_selecsls_forward.1} parent=11 // pred_region
        _
      $region72: #{_selecsls_forward.1} parent=11 // pred_fallthru
        _
      // Predicated region
      $region73: #{_selecsls_forward.1} parent=11 // pred_check
        %p498 = pneg %p412
      $region74: #{_selecsls_forward.1} parent=11 // pred_check_branch
        %500 = sbr.rel (%p498) target = $region76
      $region75: #{_selecsls_forward.1} parent=11 // pred_region
        _
      $region76: #{_selecsls_forward.1} parent=11 // pred_fallthru
        _
    $region12: #{_selecsls_forward.1} parent=5 // pred_fallthru
      _
    %p501 = scmp.lt.s32.totalorder %s24, 2
    // Predicated region
    $region77: #{_selecsls_forward.1} parent=5 // pred_check
      %p502 = pneg %p501
    $region78: #{_selecsls_forward.1} parent=5 // pred_check_branch
      %504 = sbr.rel (%p502) target = $region80
    $region79: #{_selecsls_forward.1} parent=5 // pred_region
      // Predicated region
      $region81: #{_selecsls_forward.1} parent=79 // pred_check
        %p505 = pneg %p44
      $region82: #{_selecsls_forward.1} parent=79 // pred_check_branch
        %507 = sbr.rel (%p505) target = $region84
      $region83: #{_selecsls_forward.1} parent=79 // pred_region
        %p508 = scmp.lt.s32.totalorder %s24, 1
        %s509 = scalar_select %p508, %s24, 1
        %s510 = smul.addr %s509, 3
        %s511 = smul.addr %s510, 2
        %s512 = scalar_lea.vmem %s0, %s511
      $region84: #{_selecsls_forward.1} parent=79 // pred_fallthru
        _
      // Predicated region
      $region85: #{_selecsls_forward.1} parent=79 // pred_check
        %p513 = pneg %p70
      $region86: #{_selecsls_forward.1} parent=79 // pred_check_branch
        %515 = sbr.rel (%p513) target = $region88
      $region87: #{_selecsls_forward.1} parent=79 // pred_region
        %p516 = scmp.lt.s32.totalorder %s24, 1
        %s517 = scalar_select %p516, %s24, 1
        %s518 = smul.addr %s517, 3
        %s519 = smul.addr %s518, 4
        %s520 = scalar_lea.vmem %s1, %s519
      $region88: #{_selecsls_forward.1} parent=79 // pred_fallthru
        _
    $region80: #{_selecsls_forward.1} parent=5 // pred_fallthru
      _
    %p521 = scmp.le.s32.totalorder 1, %s24
    %p522 = scmp.lt.s32.totalorder %s24, 3
    %p523 = pnand %p521, %p522
    %p524 = pneg %p523
    // Predicated region
    $region89: #{_selecsls_forward.1} parent=5 // pred_check
      _
    $region90: #{_selecsls_forward.1} parent=5 // pred_check_branch
      %526 = sbr.rel (%p523) target = $region92
    $region91: #{_selecsls_forward.1} parent=5 // pred_region
      %s527 = ssub.s32 %s24, 1
      %p528 = scmp.lt.s32.totalorder %s29, 1
      %s529 = scalar_select %p528, %s29, 1
      %s530 = smul.addr %s529, 3
      %s531 = smul.addr %s530, 2
      %s532 = scalar_lea.vmem %s0, %s531
      %p533 = pneg %p50
      %p534 = pneg %p47
      %p535 = scmp.lt.s32.totalorder %s29, 1
      %s536 = scalar_select %p535, %s29, 1
      %s537 = smul.addr %s536, 3
      %s538 = smul.addr %s537, 4
      %s539 = scalar_lea.vmem %s1, %s538
      %p540 = pneg %p76
      %p541 = pneg %p73
      %p542 = pneg %p97
      %p543 = pneg %p94
      %p544 = pneg %p118
      %p545 = pneg %p115
      %p546 = pneg %p139
      %p547 = pneg %p136
      %p548 = pneg %p160
      %p549 = pneg %p157
      %p550 = pneg %p181
      %p551 = pneg %p178
      %p552 = pneg %p202
      %p553 = pneg %p199
      %p554 = pneg %p223
      %p555 = pneg %p220
      %p556 = pneg %p244
      %p557 = pneg %p241
      %p558 = pneg %p265
      %p559 = pneg %p262
      %p560 = pneg %p286
      %p561 = pneg %p283
      %p562 = pneg %p307
      %p563 = pneg %p304
      %p564 = pneg %p328
      %p565 = pneg %p325
      %p566 = pneg %p349
      %p567 = pneg %p346
      %p568 = pneg %p370
      %p569 = pneg %p367
      %p570 = pneg %p391
      %p571 = pneg %p388
      %p572 = pneg %p412
      %p573 = pneg %p409
      %p574 = pneg %p438
      %p575 = pneg %p435
      %p576 = scmp.lt.s32.totalorder %s29, 1
      %s577 = scalar_select %p576, %s29, 1
      %s578 = smul.addr %s577, 6
      %s579 = smul.addr %s578, 8
      %s580 = scalar_lea.vmem %s18, %s579
      %p581 = scmp.lt.s32.totalorder %s29, 1
      %s582 = scalar_select %p581, %s29, 1
      %s583 = smul.addr %s582, 3
      %s584 = smul.addr %s583, 2
      %s585 = scalar_lea.vmem %s0, %s584
      %p586 = scmp.lt.s32.totalorder %s29, 1
      %s587 = scalar_select %p586, %s29, 1
      %s588 = smul.addr %s587, 3
      %s589 = smul.addr %s588, 4
      %s590 = scalar_lea.vmem %s1, %s589
      %p591 = scmp.lt.s32.totalorder %s29, 1
      %s592 = scalar_select %p591, %s29, 1
      %s593 = smul.addr %s592, 6
      %s594 = smul.addr %s593, 8
      %s595 = scalar_lea.vmem %s18, %s594
      %597 = vst [vmem:[#allocation3] sm:$0xff] 0.0
      %598 = vst [vmem:[#allocation3 + $0x20] sm:$0xff] 0.0
      %599 = vst [vmem:[#allocation4] sm:$0xff] 0.0
      %600 = vst [vmem:[#allocation4 + $0x20] sm:$0xff] 0.0
      %v601 = vld [vmem:[%s2] sm:$0x7]
      %602 = vst [vmem:[#allocation2] sm:$0xf] 0.0
      %603 = vst [vmem:[#allocation2 + $0x10] sm:$0xf] 0.0
      %v604 = vld [vmem:[%s585] sm:$0x3f]
      %v605 = vunpack.c.l.bf16 %v604
      %v606 = vunpack.c.h.bf16 %v604
      %607 = vst [vmem:[#allocation2 + $0x4] sm:$0xff] %v605
      %608 = vst [vmem:[#allocation2 + $0xc] sm:$0xf] %v606
      %v609 = vld [vmem:[#allocation2] sm:$0xff]
      %v610 = vld [vmem:[#allocation2 + $0x8] sm:$0xff]
      %v613 = vcombine.high %v609, %v609
      %v614 = vcombine.high %v610, %v610
      %615 = vrot.lane.b32.xlu0 %v609, 19
      %v616 = vpop.permute.xlu0 %615
      %617 = vrot.lane.b32.xlu0 %v613, 19
      %v618 = vpop.permute.xlu0 %617
      %619 = vrot.lane.b32.xlu0 %v610, 19
      %v620 = vpop.permute.xlu0 %619
      %621 = vrot.lane.b32.xlu0 %v614, 19
      %v622 = vpop.permute.xlu0 %621
      %vm623 = vcmask 154624
      %v624 = vsel %vm623, %v616, %v618
      %v625 = vsel %vm623, %v618, %v620
      %v626 = vsel %vm623, %v620, %v622
      %630 = vst [vmem:[#allocation5] sm:$0xf] %v624
      %631 = vst [vmem:[#allocation5 + $0x8] sm:$0xf] %v625
      %632 = vst [vmem:[#allocation5 + $0x10] sm:$0xf] %v626
      %v633 = vld [vmem:[#allocation2] sm:$0xff]
      %v634 = vld [vmem:[#allocation2 + $0x8] sm:$0xff]
      %v637 = vcombine.low %v633, %v633
      %v638 = vcombine.low %v634, %v634
      %639 = vrot.lane.b32.xlu0 %v637, 18
      %v640 = vpop.permute.xlu0 %639
      %641 = vrot.lane.b32.xlu0 %v633, 18
      %v642 = vpop.permute.xlu0 %641
      %643 = vrot.lane.b32.xlu0 %v638, 18
      %v644 = vpop.permute.xlu0 %643
      %645 = vrot.lane.b32.xlu0 %v634, 18
      %v646 = vpop.permute.xlu0 %645
      %vm647 = vcmask 146432
      %v648 = vsel %vm647, %v640, %v642
      %v649 = vsel %vm647, %v642, %v644
      %v650 = vsel %vm647, %v644, %v646
      %654 = vst [vmem:[#allocation5] sm:$0xf0] %v648
      %655 = vst [vmem:[#allocation5 + $0x8] sm:$0xf0] %v649
      %656 = vst [vmem:[#allocation5 + $0x10] sm:$0xf0] %v650
      %v657 = vld [vmem:[#allocation2] sm:$0xff]
      %v658 = vld [vmem:[#allocation2 + $0x8] sm:$0xff]
      %v661 = vcombine.high %v657, %v657
      %v662 = vcombine.high %v658, %v658
      %663 = vrot.lane.b32.xlu0 %v657, 17
      %v664 = vpop.permute.xlu0 %663
      %665 = vrot.lane.b32.xlu0 %v661, 17
      %v666 = vpop.permute.xlu0 %665
      %667 = vrot.lane.b32.xlu0 %v658, 17
      %v668 = vpop.permute.xlu0 %667
      %669 = vrot.lane.b32.xlu0 %v662, 17
      %v670 = vpop.permute.xlu0 %669
      %vm671 = vcmask 138240
      %v672 = vsel %vm671, %v664, %v666
      %v673 = vsel %vm671, %v666, %v668
      %v674 = vsel %vm671, %v668, %v670
      %678 = vst [vmem:[#allocation5 + $0x18] sm:$0xf] %v672
      %679 = vst [vmem:[#allocation5 + $0x20] sm:$0xf] %v673
      %680 = vst [vmem:[#allocation5 + $0x28] sm:$0xf] %v674
      %v681 = vld [vmem:[#allocation2] sm:$0xff]
      %v682 = vld [vmem:[#allocation2 + $0x8] sm:$0xff]
      %v685 = vcombine.low %v681, %v681
      %v686 = vcombine.low %v682, %v682
      %687 = vrot.lane.b32.xlu0 %v685, 1
      %v688 = vpop.permute.xlu0 %687
      %689 = vrot.lane.b32.xlu0 %v681, 1
      %v690 = vpop.permute.xlu0 %689
      %691 = vrot.lane.b32.xlu0 %v686, 1
      %v692 = vpop.permute.xlu0 %691
      %693 = vrot.lane.b32.xlu0 %v682, 1
      %v694 = vpop.permute.xlu0 %693
      %vm695 = vcmask 7168
      %v696 = vsel %vm695, %v688, %v690
      %v697 = vsel %vm695, %v690, %v692
      %v698 = vsel %vm695, %v692, %v694
      %702 = vst [vmem:[#allocation5 + $0x18] sm:$0xf0] %v696
      %703 = vst [vmem:[#allocation5 + $0x20] sm:$0xf0] %v697
      %704 = vst [vmem:[#allocation5 + $0x28] sm:$0xf0] %v698
      %v705 = vld [vmem:[#allocation2 + $0x4] sm:$0xff]
      %v706 = vld [vmem:[#allocation2 + $0xc] sm:$0xf]
      %v708 = vcombine.high %v705, %v705
      %710 = vst [vmem:[#allocation5 + $0x30] sm:$0xf] %v705
      %711 = vst [vmem:[#allocation5 + $0x38] sm:$0xf] %v708
      %712 = vst [vmem:[#allocation5 + $0x40] sm:$0xf] %v706
      %v713 = vld [vmem:[#allocation2 + $0x4] sm:$0xff]
      %v714 = vld [vmem:[#allocation2 + $0xc] sm:$0xff]
      %v717 = vcombine.low %v713, %v713
      %v718 = vcombine.low %v714, %v714
      %719 = vrot.lane.b32.xlu0 %v717, 127
      %v720 = vpop.permute.xlu0 %719
      %721 = vrot.lane.b32.xlu0 %v713, 127
      %v722 = vpop.permute.xlu0 %721
      %723 = vrot.lane.b32.xlu0 %v718, 127
      %v724 = vpop.permute.xlu0 %723
      %725 = vrot.lane.b32.xlu0 %v714, 127
      %v726 = vpop.permute.xlu0 %725
      %vm727 = vcmask 1039360
      %v728 = vsel %vm727, %v720, %v722
      %v729 = vsel %vm727, %v722, %v724
      %v730 = vsel %vm727, %v724, %v726
      %734 = vst [vmem:[#allocation5 + $0x30] sm:$0xf0] %v728
      %735 = vst [vmem:[#allocation5 + $0x38] sm:$0xf0] %v729
      %736 = vst [vmem:[#allocation5 + $0x40] sm:$0xf0] %v730
      %v737 = vld [vmem:[#allocation2 + $0x4] sm:$0xff]
      %v738 = vld [vmem:[#allocation2 + $0xc] sm:$0xff]
      %v741 = vcombine.high %v737, %v737
      %v742 = vcombine.high %v738, %v738
      %743 = vrot.lane.b32.xlu0 %v737, 111
      %v744 = vpop.permute.xlu0 %743
      %745 = vrot.lane.b32.xlu0 %v741, 111
      %v746 = vpop.permute.xlu0 %745
      %747 = vrot.lane.b32.xlu0 %v738, 111
      %v748 = vpop.permute.xlu0 %747
      %749 = vrot.lane.b32.xlu0 %v742, 111
      %v750 = vpop.permute.xlu0 %749
      %vm751 = vcmask 908288
      %v752 = vsel %vm751, %v744, %v746
      %v753 = vsel %vm751, %v746, %v748
      %v754 = vsel %vm751, %v748, %v750
      %758 = vst [vmem:[#allocation5 + $0x48] sm:$0xf] %v752
      %759 = vst [vmem:[#allocation5 + $0x50] sm:$0xf] %v753
      %760 = vst [vmem:[#allocation5 + $0x58] sm:$0xf] %v754
      %v761 = vld [vmem:[#allocation2 + $0x4] sm:$0xff]
      %v762 = vld [vmem:[#allocation2 + $0xc] sm:$0xff]
      %v765 = vcombine.low %v761, %v761
      %v766 = vcombine.low %v762, %v762
      %767 = vrot.lane.b32.xlu0 %v765, 110
      %v768 = vpop.permute.xlu0 %767
      %769 = vrot.lane.b32.xlu0 %v761, 110
      %v770 = vpop.permute.xlu0 %769
      %771 = vrot.lane.b32.xlu0 %v766, 110
      %v772 = vpop.permute.xlu0 %771
      %773 = vrot.lane.b32.xlu0 %v762, 110
      %v774 = vpop.permute.xlu0 %773
      %vm775 = vcmask 900096
      %v776 = vsel %vm775, %v768, %v770
      %v777 = vsel %vm775, %v770, %v772
      %v778 = vsel %vm775, %v772, %v774
      %782 = vst [vmem:[#allocation5 + $0x48] sm:$0xf0] %v776
      %783 = vst [vmem:[#allocation5 + $0x50] sm:$0xf0] %v777
      %784 = vst [vmem:[#allocation5 + $0x58] sm:$0xf0] %v778
      %v785 = vld [vmem:[#allocation2 + $0x4] sm:$0xff]
      %v786 = vld [vmem:[#allocation2 + $0xc] sm:$0xff]
      %v789 = vcombine.high %v785, %v785
      %v790 = vcombine.high %v786, %v786
      %791 = vrot.lane.b32.xlu0 %v785, 109
      %v792 = vpop.permute.xlu0 %791
      %793 = vrot.lane.b32.xlu0 %v789, 109
      %v794 = vpop.permute.xlu0 %793
      %795 = vrot.lane.b32.xlu0 %v786, 109
      %v796 = vpop.permute.xlu0 %795
      %797 = vrot.lane.b32.xlu0 %v790, 109
      %v798 = vpop.permute.xlu0 %797
      %vm799 = vcmask 891904
      %v800 = vsel %vm799, %v792, %v794
      %v801 = vsel %vm799, %v794, %v796
      %v802 = vsel %vm799, %v796, %v798
      %806 = vst [vmem:[#allocation5 + $0x60] sm:$0xf] %v800
      %807 = vst [vmem:[#allocation5 + $0x68] sm:$0xf] %v801
      %808 = vst [vmem:[#allocation5 + $0x70] sm:$0xf] %v802
      %v809 = vld [vmem:[%s3] sm:$0xf]
      %v810 = vld [vmem:[#allocation5] sm:$0xff]
      %v811 = vld [vmem:[#allocation5 + $0x8] sm:$0xff]
      %v812 = vld [vmem:[#allocation5 + $0x10] sm:$0xff]
      %v813 = vld [vmem:[#allocation5 + $0x18] sm:$0xff]
      %v814 = vld [vmem:[#allocation5 + $0x20] sm:$0xff]
      %v815 = vld [vmem:[#allocation5 + $0x28] sm:$0xff]
      %v816 = vld [vmem:[#allocation5 + $0x30] sm:$0xff]
      %v817 = vld [vmem:[#allocation5 + $0x38] sm:$0xff]
      %v818 = vld [vmem:[#allocation5 + $0x40] sm:$0xff]
      %v819 = vld [vmem:[#allocation5 + $0x48] sm:$0xff]
      %v820 = vld [vmem:[#allocation5 + $0x50] sm:$0xff]
      %v821 = vld [vmem:[#allocation5 + $0x58] sm:$0xff]
      %v822 = vld [vmem:[#allocation5 + $0x60] sm:$0xf]
      %v823 = vld [vmem:[#allocation5 + $0x68] sm:$0xf]
      %v824 = vld [vmem:[#allocation5 + $0x70] sm:$0xf]
      %v825 = vpack.c.bf16 %v813, %v810
      %v826 = vpack.c.bf16 %v814, %v811
      %v827 = vpack.c.bf16 %v815, %v812
      %v828 = vpack.c.bf16 %v819, %v816
      %v829 = vpack.c.bf16 %v820, %v817
      %v830 = vpack.c.bf16 %v821, %v818
      %v831 = vpack.c.bf16 %v822, %v822
      %v832 = vpack.c.bf16 %v823, %v823
      %v833 = vpack.c.bf16 %v824, %v824
      %v834 = vld [vmem:[%s4] sm:$0xff]
      %836 = vset.pattern.permute.xlu0 0
      %837 = vperm.xlu0 %836, %v834
      %v838 = vpop.permute.xlu0 %837
      %vm840 = vcmask 293888
      %v842 = vsel %vm840, %v809, 0
      %vm844 = vcmask 1041408
      %v846 = vsel %vm844, %v831, 0
      %v849 = vsel %vm844, %v832, 0
      %v852 = vsel %vm844, %v833, 0
      %854 = vmatprep.subr.bf16.mxu0 %v826
      %855 = vmatpush1.bf16.msra.mxu0 %v825
      %856 = vmatprep.subr.bf16.mxu0 %v829
      %857 = vmatpush1.bf16.msra.mxu0 %v828
      %858 = vmatprep.subr.bf16.mxu0 %v849
      %859 = vmatpush1.bf16.msra.mxu0 %v846
      %860 = vmatprep.subr.bf16.mxu0 0
      %861 = vmatpush1.bf16.msra.mxu0 0
      %862 = vmatprep.subr.bf16.mxu0 0
      %863 = vmatpush1.bf16.msra.mxu0 0
      %864 = vmatprep.subr.bf16.mxu0 0
      %865 = vmatpush1.bf16.msra.mxu0 0
      %866 = vmatprep.subr.bf16.mxu0 0
      %867 = vmatpush1.bf16.msra.mxu0 0
      %868 = vmatprep.subr.bf16.mxu0 0
      %869 = vmatpush1.bf16.msra.mxu0 0
      %870 = vmatprep.subr.bf16.mxu0 0
      %871 = vmatpush1.bf16.msra.mxu0 0
      %872 = vmatprep.subr.bf16.mxu0 0
      %873 = vmatpush1.bf16.msra.mxu0 0
      %874 = vmatprep.subr.bf16.mxu0 0
      %875 = vmatpush1.bf16.msra.mxu0 0
      %876 = vmatprep.subr.bf16.mxu0 0
      %877 = vmatpush1.bf16.msra.mxu0 0
      %878 = vmatprep.subr.bf16.mxu0 0
      %879 = vmatpush1.bf16.msra.mxu0 0
      %880 = vmatprep.subr.bf16.mxu0 0
      %881 = vmatpush1.bf16.msra.mxu0 0
      %882 = vmatprep.subr.bf16.mxu0 0
      %883 = vmatpush1.bf16.msra.mxu0 0
      %884 = vmatprep.subr.bf16.mxu0 0
      %885 = vmatpush1.bf16.msra.mxu0 0
      %886 = vmatprep.mubr.bf16.mxu0 0
      %887 = vmatmul.mubr.bf16.gmra.mrb[0].mxu0 %v842
      %v888 = vpop.f32.mrb[0].mxu0
      %v889 = vadd.f32 %v838, %v888
      %v890 = vpop.f32.mrb[0].mxu0
      %v891 = vadd.f32 %v838, %v890
      %v892 = vpop.f32.mrb[0].mxu0
      %v893 = vpop.f32.mrb[0].mxu0
      %894 = vdwg.mxu0
      %895 = vmatprep.subr.bf16.mxu0 0
      %896 = vmatpush1.bf16.msra.mxu0 %v827
      %897 = vmatprep.subr.bf16.mxu0 0
      %898 = vmatpush1.bf16.msra.mxu0 %v830
      %899 = vmatprep.subr.bf16.mxu0 0
      %900 = vmatpush1.bf16.msra.mxu0 %v852
      %901 = vmatprep.subr.bf16.mxu0 0
      %902 = vmatpush1.bf16.msra.mxu0 0
      %903 = vmatprep.subr.bf16.mxu0 0
      %904 = vmatpush1.bf16.msra.mxu0 0
      %905 = vmatprep.subr.bf16.mxu0 0
      %906 = vmatpush1.bf16.msra.mxu0 0
      %907 = vmatprep.subr.bf16.mxu0 0
      %908 = vmatpush1.bf16.msra.mxu0 0
      %909 = vmatprep.subr.bf16.mxu0 0
      %910 = vmatpush1.bf16.msra.mxu0 0
      %911 = vmatprep.subr.bf16.mxu0 0
      %912 = vmatpush1.bf16.msra.mxu0 0
      %913 = vmatprep.subr.bf16.mxu0 0
      %914 = vmatpush1.bf16.msra.mxu0 0
      %915 = vmatprep.subr.bf16.mxu0 0
      %916 = vmatpush1.bf16.msra.mxu0 0
      %917 = vmatprep.subr.bf16.mxu0 0
      %918 = vmatpush1.bf16.msra.mxu0 0
      %919 = vmatprep.subr.bf16.mxu0 0
      %920 = vmatpush1.bf16.msra.mxu0 0
      %921 = vmatprep.subr.bf16.mxu0 0
      %922 = vmatpush1.bf16.msra.mxu0 0
      %923 = vmatprep.subr.bf16.mxu0 0
      %924 = vmatpush1.bf16.msra.mxu0 0
      %925 = vmatprep.subr.bf16.mxu0 0
      %926 = vmatpush1.bf16.msra.mxu0 0
      %927 = vmatprep.mubr.bf16.mxu0 0
      %928 = vmatmul.mubr.bf16.gmra.mrb[0].mxu0 %v842
      %v929 = vpop.f32.mrb[0].mxu0
      %v930 = vadd.f32 %v838, %v929
      %v931 = vpop.f32.mrb[0].mxu0
      %v932 = vpop.f32.mrb[0].mxu0
      %v933 = vpop.f32.mrb[0].mxu0
      %934 = vdwg.mxu0
      %v935 = vmax.f32 %v889, 0.0
      %v936 = vmax.f32 %v891, 0.0
      %v937 = vmax.f32 %v930, 0.0
      %v938 = vld [vmem:[%s5] sm:$0xf]
      %v939 = vpack.c.bf16 %v935, %v935
      %v940 = vpack.c.bf16 %v936, %v936
      %v941 = vpack.c.bf16 %v937, %v937
      %v942 = vld [vmem:[%s6] sm:$0xff]
      %944 = vset.pattern.permute.xlu0 0
      %945 = vperm.xlu0 %944, %v942
      %v946 = vpop.permute.xlu0 %945
      %vm948 = vcmask 64512
      %v950 = vsel %vm948, %v938, 0
      %vm952 = vcmask 1043456
      %v954 = vsel %vm952, %v939, 0
      %v957 = vsel %vm952, %v940, 0
      %v960 = vsel %vm952, %v941, 0
      %962 = vmatprep.subr.bf16.mxu0 %v957
      %963 = vmatpush1.bf16.msra.mxu0 %v954
      %964 = vmatprep.subr.bf16.mxu0 0
      %965 = vmatpush1.bf16.msra.mxu0 0
      %966 = vmatprep.subr.bf16.mxu0 0
      %967 = vmatpush1.bf16.msra.mxu0 0
      %968 = vmatprep.subr.bf16.mxu0 0
      %969 = vmatpush1.bf16.msra.mxu0 0
      %970 = vmatprep.subr.bf16.mxu0 0
      %971 = vmatpush1.bf16.msra.mxu0 0
      %972 = vmatprep.subr.bf16.mxu0 0
      %973 = vmatpush1.bf16.msra.mxu0 0
      %974 = vmatprep.subr.bf16.mxu0 0
      %975 = vmatpush1.bf16.msra.mxu0 0
      %976 = vmatprep.subr.bf16.mxu0 0
      %977 = vmatpush1.bf16.msra.mxu0 0
      %978 = vmatprep.subr.bf16.mxu0 0
      %979 = vmatpush1.bf16.msra.mxu0 0
      %980 = vmatprep.subr.bf16.mxu0 0
      %981 = vmatpush1.bf16.msra.mxu0 0
      %982 = vmatprep.subr.bf16.mxu0 0
      %983 = vmatpush1.bf16.msra.mxu0 0
      %984 = vmatprep.subr.bf16.mxu0 0
      %985 = vmatpush1.bf16.msra.mxu0 0
      %986 = vmatprep.subr.bf16.mxu0 0
      %987 = vmatpush1.bf16.msra.mxu0 0
      %988 = vmatprep.subr.bf16.mxu0 0
      %989 = vmatpush1.bf16.msra.mxu0 0
      %990 = vmatprep.subr.bf16.mxu0 0
      %991 = vmatpush1.bf16.msra.mxu0 0
      %992 = vmatprep.subr.bf16.mxu0 0
      %993 = vmatpush1.bf16.msra.mxu0 0
      %994 = vmatprep.mubr.bf16.mxu0 0
      %995 = vmatmul.mubr.bf16.gmra.mrb[0].mxu0 %v950
      %v996 = vpop.f32.mrb[0].mxu0
      %v997 = vadd.f32 %v946, %v996
      %v998 = vpop.f32.mrb[0].mxu0
      %v999 = vadd.f32 %v946, %v998
      %v1000 = vpop.f32.mrb[0].mxu0
      %v1001 = vpop.f32.mrb[0].mxu0
      %1002 = vdwg.mxu0
      %1003 = vmatprep.subr.bf16.mxu0 0
      %1004 = vmatpush1.bf16.msra.mxu0 %v960
      %1005 = vmatprep.subr.bf16.mxu0 0
      %1006 = vmatpush1.bf16.msra.mxu0 0
      %1007 = vmatprep.subr.bf16.mxu0 0
      %1008 = vmatpush1.bf16.msra.mxu0 0
      %1009 = vmatprep.subr.bf16.mxu0 0
      %1010 = vmatpush1.bf16.msra.mxu0 0
      %1011 = vmatprep.subr.bf16.mxu0 0
      %1012 = vmatpush1.bf16.msra.mxu0 0
      %1013 = vmatprep.subr.bf16.mxu0 0
      %1014 = vmatpush1.bf16.msra.mxu0 0
      %1015 = vmatprep.subr.bf16.mxu0 0
      %1016 = vmatpush1.bf16.msra.mxu0 0
      %1017 = vmatprep.subr.bf16.mxu0 0
      %1018 = vmatpush1.bf16.msra.mxu0 0
      %1019 = vmatprep.subr.bf16.mxu0 0
      %1020 = vmatpush1.bf16.msra.mxu0 0
      %1021 = vmatprep.subr.bf16.mxu0 0
      %1022 = vmatpush1.bf16.msra.mxu0 0
      %1023 = vmatprep.subr.bf16.mxu0 0
      %1024 = vmatpush1.bf16.msra.mxu0 0
      %1025 = vmatprep.subr.bf16.mxu0 0
      %1026 = vmatpush1.bf16.msra.mxu0 0
      %1027 = vmatprep.subr.bf16.mxu0 0
      %1028 = vmatpush1.bf16.msra.mxu0 0
      %1029 = vmatprep.subr.bf16.mxu0 0
      %1030 = vmatpush1.bf16.msra.mxu0 0
      %1031 = vmatprep.subr.bf16.mxu0 0
      %1032 = vmatpush1.bf16.msra.mxu0 0
      %1033 = vmatprep.subr.bf16.mxu0 0
      %1034 = vmatpush1.bf16.msra.mxu0 0
      %1035 = vmatprep.mubr.bf16.mxu0 0
      %1036 = vmatmul.mubr.bf16.gmra.mrb[0].mxu0 %v950
      %v1037 = vpop.f32.mrb[0].mxu0
      %v1038 = vadd.f32 %v946, %v1037
      %v1039 = vpop.f32.mrb[0].mxu0
      %v1040 = vpop.f32.mrb[0].mxu0
      %v1041 = vpop.f32.mrb[0].mxu0
      %1042 = vdwg.mxu0
      %v1043 = vmax.f32 %v997, 0.0
      %v1044 = vmax.f32 %v999, 0.0
      %v1045 = vmax.f32 %v1038, 0.0
      %v1047 = vlaneseq
      %v1048 = vshrl.u32 %v1047, 7
      %v1049 = vsub.s32 0, %v1048
      %v1050 = vrot.slane %v601, %v1049
      %v1051 = vlaneseq
      %v1052 = vshrl.u32 %v1051, 7
      %v1053 = vsub.s32 1, %v1052
      %v1054 = vrot.slane %v601, %v1053
      %v1055 = vlaneseq
      %v1056 = vshrl.u32 %v1055, 7
      %v1057 = vsub.s32 2, %v1056
      %v1058 = vrot.slane %v601, %v1057
      %v1062 = vmul.f32 %v1043, %v1050
      %v1063 = vmul.f32 %v1044, %v1054
      %v1064 = vmul.f32 %v1045, %v1058
      %1065 = vst [vmem:[#allocation3 + $0x8] sm:$0xff] %v1062
      %1066 = vst [vmem:[#allocation3 + $0x10] sm:$0xff] %v1063
      %1067 = vst [vmem:[#allocation3 + $0x18] sm:$0xff] %v1064
      %v1068 = vld [vmem:[#allocation3] sm:$0xff]
      %v1069 = vld [vmem:[#allocation3 + $0x8] sm:$0xff]
      %v1070 = vld [vmem:[#allocation3 + $0x10] sm:$0xff]
      %v1071 = vld [vmem:[#allocation3 + $0x18] sm:$0xff]
      %1076 = vrot.lane.b32.xlu0 %v1068, 19
      %v1077 = vpop.permute.xlu0 %1076
      %1078 = vrot.lane.b32.xlu0 %v1069, 19
      %v1079 = vpop.permute.xlu0 %1078
      %1080 = vrot.lane.b32.xlu0 %v1070, 19
      %v1081 = vpop.permute.xlu0 %1080
      %1082 = vrot.lane.b32.xlu0 %v1071, 19
      %v1083 = vpop.permute.xlu0 %1082
      %v1084 = vsel %vm623, %v1077, %v1079
      %v1085 = vsel %vm623, %v1079, %v1081
      %v1086 = vsel %vm623, %v1081, %v1083
      %1090 = vst [vmem:[#allocation5] sm:$0xff] %v1084
      %1091 = vst [vmem:[#allocation5 + $0x8] sm:$0xff] %v1085
      %1092 = vst [vmem:[#allocation5 + $0x10] sm:$0xff] %v1086
      %v1093 = vld [vmem:[#allocation3] sm:$0xff]
      %v1094 = vld [vmem:[#allocation3 + $0x8] sm:$0xff]
      %v1095 = vld [vmem:[#allocation3 + $0x10] sm:$0xff]
      %v1096 = vld [vmem:[#allocation3 + $0x18] sm:$0xff]
      %1101 = vrot.lane.b32.xlu0 %v1093, 18
      %v1102 = vpop.permute.xlu0 %1101
      %1103 = vrot.lane.b32.xlu0 %v1094, 18
      %v1104 = vpop.permute.xlu0 %1103
      %1105 = vrot.lane.b32.xlu0 %v1095, 18
      %v1106 = vpop.permute.xlu0 %1105
      %1107 = vrot.lane.b32.xlu0 %v1096, 18
      %v1108 = vpop.permute.xlu0 %1107
      %v1109 = vsel %vm647, %v1102, %v1104
      %v1110 = vsel %vm647, %v1104, %v1106
      %v1111 = vsel %vm647, %v1106, %v1108
      %1115 = vst [vmem:[#allocation5 + $0x18] sm:$0xff] %v1109
      %1116 = vst [vmem:[#allocation5 + $0x20] sm:$0xff] %v1110
      %1117 = vst [vmem:[#allocation5 + $0x28] sm:$0xff] %v1111
      %v1118 = vld [vmem:[#allocation3] sm:$0xff]
      %v1119 = vld [vmem:[#allocation3 + $0x8] sm:$0xff]
      %v1120 = vld [vmem:[#allocation3 + $0x10] sm:$0xff]
      %v1121 = vld [vmem:[#allocation3 + $0x18] sm:$0xff]
      %1126 = vrot.lane.b32.xlu0 %v1118, 17
      %v1127 = vpop.permute.xlu0 %1126
      %1128 = vrot.lane.b32.xlu0 %v1119, 17
      %v1129 = vpop.permute.xlu0 %1128
      %1130 = vrot.lane.b32.xlu0 %v1120, 17
      %v1131 = vpop.permute.xlu0 %1130
      %1132 = vrot.lane.b32.xlu0 %v1121, 17
      %v1133 = vpop.permute.xlu0 %1132
      %v1134 = vsel %vm671, %v1127, %v1129
      %v1135 = vsel %vm671, %v1129, %v1131
      %v1136 = vsel %vm671, %v1131, %v1133
      %1140 = vst [vmem:[#allocation5 + $0x30] sm:$0xff] %v1134
      %1141 = vst [vmem:[#allocation5 + $0x38] sm:$0xff] %v1135
      %1142 = vst [vmem:[#allocation5 + $0x40] sm:$0xff] %v1136
      %v1143 = vld [vmem:[#allocation3] sm:$0xff]
      %v1144 = vld [vmem:[#allocation3 + $0x8] sm:$0xff]
      %v1145 = vld [vmem:[#allocation3 + $0x10] sm:$0xff]
      %v1146 = vld [vmem:[#allocation3 + $0x18] sm:$0xff]
      %1151 = vrot.lane.b32.xlu0 %v1143, 1
      %v1152 = vpop.permute.xlu0 %1151
      %1153 = vrot.lane.b32.xlu0 %v1144, 1
      %v1154 = vpop.permute.xlu0 %1153
      %1155 = vrot.lane.b32.xlu0 %v1145, 1
      %v1156 = vpop.permute.xlu0 %1155
      %1157 = vrot.lane.b32.xlu0 %v1146, 1
      %v1158 = vpop.permute.xlu0 %1157
      %v1159 = vsel %vm695, %v1152, %v1154
      %v1160 = vsel %vm695, %v1154, %v1156
      %v1161 = vsel %vm695, %v1156, %v1158
      %1165 = vst [vmem:[#allocation5 + $0x48] sm:$0xff] %v1159
      %1166 = vst [vmem:[#allocation5 + $0x50] sm:$0xff] %v1160
      %1167 = vst [vmem:[#allocation5 + $0x58] sm:$0xff] %v1161
      %v1168 = vld [vmem:[#allocation3 + $0x8] sm:$0xff]
      %v1169 = vld [vmem:[#allocation3 + $0x10] sm:$0xff]
      %v1170 = vld [vmem:[#allocation3 + $0x18] sm:$0xff]
      %1171 = vst [vmem:[#allocation5 + $0x60] sm:$0xff] %v1168
      %1172 = vst [vmem:[#allocation5 + $0x68] sm:$0xff] %v1169
      %1173 = vst [vmem:[#allocation5 + $0x70] sm:$0xff] %v1170
      %v1174 = vld [vmem:[#allocation3 + $0x8] sm:$0xff]
      %v1175 = vld [vmem:[#allocation3 + $0x10] sm:$0xff]
      %v1176 = vld [vmem:[#allocation3 + $0x18] sm:$0xff]
      %v1177 = vld [vmem:[#allocation3 + $0x20] sm:$0xff]
      %1182 = vrot.lane.b32.xlu0 %v1174, 127
      %v1183 = vpop.permute.xlu0 %1182
      %1184 = vrot.lane.b32.xlu0 %v1175, 127
      %v1185 = vpop.permute.xlu0 %1184
      %1186 = vrot.lane.b32.xlu0 %v1176, 127
      %v1187 = vpop.permute.xlu0 %1186
      %1188 = vrot.lane.b32.xlu0 %v1177, 127
      %v1189 = vpop.permute.xlu0 %1188
      %v1190 = vsel %vm727, %v1183, %v1185
      %v1191 = vsel %vm727, %v1185, %v1187
      %v1192 = vsel %vm727, %v1187, %v1189
      %1196 = vst [vmem:[#allocation5 + $0x78] sm:$0xff] %v1190
      %1197 = vst [vmem:[#allocation5 + $0x80] sm:$0xff] %v1191
      %1198 = vst [vmem:[#allocation5 + $0x88] sm:$0xff] %v1192
      %v1199 = vld [vmem:[#allocation3 + $0x8] sm:$0xff]
      %v1200 = vld [vmem:[#allocation3 + $0x10] sm:$0xff]
      %v1201 = vld [vmem:[#allocation3 + $0x18] sm:$0xff]
      %v1202 = vld [vmem:[#allocation3 + $0x20] sm:$0xff]
      %1207 = vrot.lane.b32.xlu0 %v1199, 111
      %v1208 = vpop.permute.xlu0 %1207
      %1209 = vrot.lane.b32.xlu0 %v1200, 111
      %v1210 = vpop.permute.xlu0 %1209
      %1211 = vrot.lane.b32.xlu0 %v1201, 111
      %v1212 = vpop.permute.xlu0 %1211
      %1213 = vrot.lane.b32.xlu0 %v1202, 111
      %v1214 = vpop.permute.xlu0 %1213
      %v1215 = vsel %vm751, %v1208, %v1210
      %v1216 = vsel %vm751, %v1210, %v1212
      %v1217 = vsel %vm751, %v1212, %v1214
      %1221 = vst [vmem:[#allocation5 + $0x90] sm:$0xff] %v1215
      %1222 = vst [vmem:[#allocation5 + $0x98] sm:$0xff] %v1216
      %1223 = vst [vmem:[#allocation5 + $0xa0] sm:$0xff] %v1217
      %v1224 = vld [vmem:[#allocation3 + $0x8] sm:$0xff]
      %v1225 = vld [vmem:[#allocation3 + $0x10] sm:$0xff]
      %v1226 = vld [vmem:[#allocation3 + $0x18] sm:$0xff]
      %v1227 = vld [vmem:[#allocation3 + $0x20] sm:$0xff]
      %1232 = vrot.lane.b32.xlu0 %v1224, 110
      %v1233 = vpop.permute.xlu0 %1232
      %1234 = vrot.lane.b32.xlu0 %v1225, 110
      %v1235 = vpop.permute.xlu0 %1234
      %1236 = vrot.lane.b32.xlu0 %v1226, 110
      %v1237 = vpop.permute.xlu0 %1236
      %1238 = vrot.lane.b32.xlu0 %v1227, 110
      %v1239 = vpop.permute.xlu0 %1238
      %v1240 = vsel %vm775, %v1233, %v1235
      %v1241 = vsel %vm775, %v1235, %v1237
      %v1242 = vsel %vm775, %v1237, %v1239
      %1246 = vst [vmem:[#allocation5 + $0xa8] sm:$0xff] %v1240
      %1247 = vst [vmem:[#allocation5 + $0xb0] sm:$0xff] %v1241
      %1248 = vst [vmem:[#allocation5 + $0xb8] sm:$0xff] %v1242
      %v1249 = vld [vmem:[#allocation3 + $0x8] sm:$0xff]
      %v1250 = vld [vmem:[#allocation3 + $0x10] sm:$0xff]
      %v1251 = vld [vmem:[#allocation3 + $0x18] sm:$0xff]
      %v1252 = vld [vmem:[#allocation3 + $0x20] sm:$0xff]
      %1257 = vrot.lane.b32.xlu0 %v1249, 109
      %v1258 = vpop.permute.xlu0 %1257
      %1259 = vrot.lane.b32.xlu0 %v1250, 109
      %v1260 = vpop.permute.xlu0 %1259
      %1261 = vrot.lane.b32.xlu0 %v1251, 109
      %v1262 = vpop.permute.xlu0 %1261
      %1263 = vrot.lane.b32.xlu0 %v1252, 109
      %v1264 = vpop.permute.xlu0 %1263
      %v1265 = vsel %vm799, %v1258, %v1260
      %v1266 = vsel %vm799, %v1260, %v1262
      %v1267 = vsel %vm799, %v1262, %v1264
      %1271 = vst [vmem:[#allocation5 + $0xc0] sm:$0xff] %v1265
      %1272 = vst [vmem:[#allocation5 + $0xc8] sm:$0xff] %v1266
      %1273 = vst [vmem:[#allocation5 + $0xd0] sm:$0xff] %v1267
      %v1274 = vld [vmem:[%s7] sm:$0x3]
      %v1275 = vld [vmem:[#allocation5] sm:$0xff]
      %v1276 = vld [vmem:[#allocation5 + $0x8] sm:$0xff]
      %v1277 = vld [vmem:[#allocation5 + $0x10] sm:$0xff]
      %v1278 = vld [vmem:[#allocation5 + $0x18] sm:$0xff]
      %v1279 = vld [vmem:[#allocation5 + $0x20] sm:$0xff]
      %v1280 = vld [vmem:[#allocation5 + $0x28] sm:$0xff]
      %v1281 = vld [vmem:[#allocation5 + $0x30] sm:$0xff]
      %v1282 = vld [vmem:[#allocation5 + $0x38] sm:$0xff]
      %v1283 = vld [vmem:[#allocation5 + $0x40] sm:$0xff]
      %v1284 = vld [vmem:[#allocation5 + $0x48] sm:$0xff]
      %v1285 = vld [vmem:[#allocation5 + $0x50] sm:$0xff]
      %v1286 = vld [vmem:[#allocation5 + $0x58] sm:$0xff]
      %v1287 = vld [vmem:[#allocation5 + $0x60] sm:$0xff]
      %v1288 = vld [vmem:[#allocation5 + $0x68] sm:$0xff]
      %v1289 = vld [vmem:[#allocation5 + $0x70] sm:$0xff]
      %v1290 = vld [vmem:[#allocation5 + $0x78] sm:$0xff]
      %v1291 = vld [vmem:[#allocation5 + $0x80] sm:$0xff]
      %v1292 = vld [vmem:[#allocation5 + $0x88] sm:$0xff]
      %v1293 = vld [vmem:[#allocation5 + $0x90] sm:$0xff]
      %v1294 = vld [vmem:[#allocation5 + $0x98] sm:$0xff]
      %v1295 = vld [vmem:[#allocation5 + $0xa0] sm:$0xff]
      %v1296 = vld [vmem:[#allocation5 + $0xa8] sm:$0xff]
      %v1297 = vld [vmem:[#allocation5 + $0xb0] sm:$0xff]
      %v1298 = vld [vmem:[#allocation5 + $0xb8] sm:$0xff]
      %v1299 = vld [vmem:[#allocation5 + $0xc0] sm:$0xff]
      %v1300 = vld [vmem:[#allocation5 + $0xc8] sm:$0xff]
      %v1301 = vld [vmem:[#allocation5 + $0xd0] sm:$0xff]
      %v1302 = vpack.c.bf16 %v1278, %v1275
      %v1303 = vpack.c.bf16 %v1279, %v1276
      %v1304 = vpack.c.bf16 %v1280, %v1277
      %v1305 = vpack.c.bf16 %v1284, %v1281
      %v1306 = vpack.c.bf16 %v1285, %v1282
      %v1307 = vpack.c.bf16 %v1286, %v1283
      %v1308 = vpack.c.bf16 %v1290, %v1287
      %v1309 = vpack.c.bf16 %v1291, %v1288
      %v1310 = vpack.c.bf16 %v1292, %v1289
      %v1311 = vpack.c.bf16 %v1296, %v1293
      %v1312 = vpack.c.bf16 %v1297, %v1294
      %v1313 = vpack.c.bf16 %v1298, %v1295
      %v1314 = vpack.c.bf16 %v1299, %v1299
      %v1315 = vpack.c.bf16 %v1300, %v1300
      %v1316 = vpack.c.bf16 %v1301, %v1301
      %v1317 = vld [vmem:[%s8] sm:$0xf]
      %1319 = vset.pattern.permute.xlu0 0
      %1320 = vperm.xlu0 %1319, %v1317
      %v1321 = vpop.permute.xlu0 %1320
      %vm1323 = vcmask 588800
      %v1325 = vsel %vm1323, %v1274, 0
      %v1328 = vsel %vm952, %v1314, 0
      %v1331 = vsel %vm952, %v1315, 0
      %v1334 = vsel %vm952, %v1316, 0
      %1336 = vmatprep.subr.bf16.mxu0 %v1303
      %1337 = vmatpush1.bf16.msra.mxu0 %v1302
      %1338 = vmatprep.subr.bf16.mxu0 %v1306
      %1339 = vmatpush1.bf16.msra.mxu0 %v1305
      %1340 = vmatprep.subr.bf16.mxu0 %v1309
      %1341 = vmatpush1.bf16.msra.mxu0 %v1308
      %1342 = vmatprep.subr.bf16.mxu0 %v1312
      %1343 = vmatpush1.bf16.msra.mxu0 %v1311
      %1344 = vmatprep.subr.bf16.mxu0 %v1331
      %1345 = vmatpush1.bf16.msra.mxu0 %v1328
      %1346 = vmatprep.subr.bf16.mxu0 0
      %1347 = vmatpush1.bf16.msra.mxu0 0
      %1348 = vmatprep.subr.bf16.mxu0 0
      %1349 = vmatpush1.bf16.msra.mxu0 0
      %1350 = vmatprep.subr.bf16.mxu0 0
      %1351 = vmatpush1.bf16.msra.mxu0 0
      %1352 = vmatprep.subr.bf16.mxu0 0
      %1353 = vmatpush1.bf16.msra.mxu0 0
      %1354 = vmatprep.subr.bf16.mxu0 0
      %1355 = vmatpush1.bf16.msra.mxu0 0
      %1356 = vmatprep.subr.bf16.mxu0 0
      %1357 = vmatpush1.bf16.msra.mxu0 0
      %1358 = vmatprep.subr.bf16.mxu0 0
      %1359 = vmatpush1.bf16.msra.mxu0 0
      %1360 = vmatprep.subr.bf16.mxu0 0
      %1361 = vmatpush1.bf16.msra.mxu0 0
      %1362 = vmatprep.subr.bf16.mxu0 0
      %1363 = vmatpush1.bf16.msra.mxu0 0
      %1364 = vmatprep.subr.bf16.mxu0 0
      %1365 = vmatpush1.bf16.msra.mxu0 0
      %1366 = vmatprep.subr.bf16.mxu0 0
      %1367 = vmatpush1.bf16.msra.mxu0 0
      %1368 = vmatprep.mubr.bf16.mxu0 0
      %1369 = vmatmul.mubr.bf16.gmra.mrb[0].mxu0 %v1325
      %v1370 = vpop.f32.mrb[0].mxu0
      %v1371 = vadd.f32 %v1321, %v1370
      %v1372 = vpop.f32.mrb[0].mxu0
      %v1373 = vadd.f32 %v1321, %v1372
      %v1374 = vpop.f32.mrb[0].mxu0
      %v1375 = vpop.f32.mrb[0].mxu0
      %1376 = vdwg.mxu0
      %1377 = vmatprep.subr.bf16.mxu0 0
      %1378 = vmatpush1.bf16.msra.mxu0 %v1304
      %1379 = vmatprep.subr.bf16.mxu0 0
      %1380 = vmatpush1.bf16.msra.mxu0 %v1307
      %1381 = vmatprep.subr.bf16.mxu0 0
      %1382 = vmatpush1.bf16.msra.mxu0 %v1310
      %1383 = vmatprep.subr.bf16.mxu0 0
      %1384 = vmatpush1.bf16.msra.mxu0 %v1313
      %1385 = vmatprep.subr.bf16.mxu0 0
      %1386 = vmatpush1.bf16.msra.mxu0 %v1334
      %1387 = vmatprep.subr.bf16.mxu0 0
      %1388 = vmatpush1.bf16.msra.mxu0 0
      %1389 = vmatprep.subr.bf16.mxu0 0
      %1390 = vmatpush1.bf16.msra.mxu0 0
      %1391 = vmatprep.subr.bf16.mxu0 0
      %1392 = vmatpush1.bf16.msra.mxu0 0
      %1393 = vmatprep.subr.bf16.mxu0 0
      %1394 = vmatpush1.bf16.msra.mxu0 0
      %1395 = vmatprep.subr.bf16.mxu0 0
      %1396 = vmatpush1.bf16.msra.mxu0 0
      %1397 = vmatprep.subr.bf16.mxu0 0
      %1398 = vmatpush1.bf16.msra.mxu0 0
      %1399 = vmatprep.subr.bf16.mxu0 0
      %1400 = vmatpush1.bf16.msra.mxu0 0
      %1401 = vmatprep.subr.bf16.mxu0 0
      %1402 = vmatpush1.bf16.msra.mxu0 0
      %1403 = vmatprep.subr.bf16.mxu0 0
      %1404 = vmatpush1.bf16.msra.mxu0 0
      %1405 = vmatprep.subr.bf16.mxu0 0
      %1406 = vmatpush1.bf16.msra.mxu0 0
      %1407 = vmatprep.subr.bf16.mxu0 0
      %1408 = vmatpush1.bf16.msra.mxu0 0
      %1409 = vmatprep.mubr.bf16.mxu0 0
      %1410 = vmatmul.mubr.bf16.gmra.mrb[0].mxu0 %v1325
      %v1411 = vpop.f32.mrb[0].mxu0
      %v1412 = vadd.f32 %v1321, %v1411
      %v1413 = vpop.f32.mrb[0].mxu0
      %v1414 = vpop.f32.mrb[0].mxu0
      %v1415 = vpop.f32.mrb[0].mxu0
      %1416 = vdwg.mxu0
      %v1417 = vmax.f32 %v1371, 0.0
      %v1418 = vmax.f32 %v1373, 0.0
      %v1419 = vmax.f32 %v1412, 0.0
      %v1420 = vld [vmem:[%s9] sm:$0xf]
      %v1421 = vpack.c.bf16 %v1417, %v1417
      %v1422 = vpack.c.bf16 %v1418, %v1418
      %v1423 = vpack.c.bf16 %v1419, %v1419
      %v1424 = vld [vmem:[%s10] sm:$0xff]
      %1426 = vset.pattern.permute.xlu0 0
      %1427 = vperm.xlu0 %1426, %v1424
      %v1428 = vpop.permute.xlu0 %1427
      %vm1430 = vcmask 31744
      %v1432 = vsel %vm1430, %v1420, 0
      %v1435 = vsel %vm844, %v1421, 0
      %v1438 = vsel %vm844, %v1422, 0
      %v1441 = vsel %vm844, %v1423, 0
      %1443 = vmatprep.subr.bf16.mxu0 %v1438
      %1444 = vmatpush1.bf16.msra.mxu0 %v1435
      %1445 = vmatprep.subr.bf16.mxu0 0
      %1446 = vmatpush1.bf16.msra.mxu0 0
      %1447 = vmatprep.subr.bf16.mxu0 0
      %1448 = vmatpush1.bf16.msra.mxu0 0
      %1449 = vmatprep.subr.bf16.mxu0 0
      %1450 = vmatpush1.bf16.msra.mxu0 0
      %1451 = vmatprep.subr.bf16.mxu0 0
      %1452 = vmatpush1.bf16.msra.mxu0 0
      %1453 = vmatprep.subr.bf16.mxu0 0
      %1454 = vmatpush1.bf16.msra.mxu0 0
      %1455 = vmatprep.subr.bf16.mxu0 0
      %1456 = vmatpush1.bf16.msra.mxu0 0
      %1457 = vmatprep.subr.bf16.mxu0 0
      %1458 = vmatpush1.bf16.msra.mxu0 0
      %1459 = vmatprep.subr.bf16.mxu0 0
      %1460 = vmatpush1.bf16.msra.mxu0 0
      %1461 = vmatprep.subr.bf16.mxu0 0
      %1462 = vmatpush1.bf16.msra.mxu0 0
      %1463 = vmatprep.subr.bf16.mxu0 0
      %1464 = vmatpush1.bf16.msra.mxu0 0
      %1465 = vmatprep.subr.bf16.mxu0 0
      %1466 = vmatpush1.bf16.msra.mxu0 0
      %1467 = vmatprep.subr.bf16.mxu0 0
      %1468 = vmatpush1.bf16.msra.mxu0 0
      %1469 = vmatprep.subr.bf16.mxu0 0
      %1470 = vmatpush1.bf16.msra.mxu0 0
      %1471 = vmatprep.subr.bf16.mxu0 0
      %1472 = vmatpush1.bf16.msra.mxu0 0
      %1473 = vmatprep.subr.bf16.mxu0 0
      %1474 = vmatpush1.bf16.msra.mxu0 0
      %1475 = vmatprep.mubr.bf16.mxu0 0
      %1476 = vmatmul.mubr.bf16.gmra.mrb[0].mxu0 %v1432
      %v1477 = vpop.f32.mrb[0].mxu0
      %v1478 = vadd.f32 %v1428, %v1477
      %v1479 = vpop.f32.mrb[0].mxu0
      %v1480 = vadd.f32 %v1428, %v1479
      %v1481 = vpop.f32.mrb[0].mxu0
      %v1482 = vpop.f32.mrb[0].mxu0
      %1483 = vdwg.mxu0
      %1484 = vmatprep.subr.bf16.mxu0 0
      %1485 = vmatpush1.bf16.msra.mxu0 %v1441
      %1486 = vmatprep.subr.bf16.mxu0 0
      %1487 = vmatpush1.bf16.msra.mxu0 0
      %1488 = vmatprep.subr.bf16.mxu0 0
      %1489 = vmatpush1.bf16.msra.mxu0 0
      %1490 = vmatprep.subr.bf16.mxu0 0
      %1491 = vmatpush1.bf16.msra.mxu0 0
      %1492 = vmatprep.subr.bf16.mxu0 0
      %1493 = vmatpush1.bf16.msra.mxu0 0
      %1494 = vmatprep.subr.bf16.mxu0 0
      %1495 = vmatpush1.bf16.msra.mxu0 0
      %1496 = vmatprep.subr.bf16.mxu0 0
      %1497 = vmatpush1.bf16.msra.mxu0 0
      %1498 = vmatprep.subr.bf16.mxu0 0
      %1499 = vmatpush1.bf16.msra.mxu0 0
      %1500 = vmatprep.subr.bf16.mxu0 0
      %1501 = vmatpush1.bf16.msra.mxu0 0
      %1502 = vmatprep.subr.bf16.mxu0 0
      %1503 = vmatpush1.bf16.msra.mxu0 0
      %1504 = vmatprep.subr.bf16.mxu0 0
      %1505 = vmatpush1.bf16.msra.mxu0 0
      %1506 = vmatprep.subr.bf16.mxu0 0
      %1507 = vmatpush1.bf16.msra.mxu0 0
      %1508 = vmatprep.subr.bf16.mxu0 0
      %1509 = vmatpush1.bf16.msra.mxu0 0
      %1510 = vmatprep.subr.bf16.mxu0 0
      %1511 = vmatpush1.bf16.msra.mxu0 0
      %1512 = vmatprep.subr.bf16.mxu0 0
      %1513 = vmatpush1.bf16.msra.mxu0 0
      %1514 = vmatprep.subr.bf16.mxu0 0
      %1515 = vmatpush1.bf16.msra.mxu0 0
      %1516 = vmatprep.mubr.bf16.mxu0 0
      %1517 = vmatmul.mubr.bf16.gmra.mrb[0].mxu0 %v1432
      %v1518 = vpop.f32.mrb[0].mxu0
      %v1519 = vadd.f32 %v1428, %v1518
      %v1520 = vpop.f32.mrb[0].mxu0
      %v1521 = vpop.f32.mrb[0].mxu0
      %v1522 = vpop.f32.mrb[0].mxu0
      %1523 = vdwg.mxu0
      %v1524 = vmax.f32 %v1478, 0.0
      %v1525 = vmax.f32 %v1480, 0.0
      %v1526 = vmax.f32 %v1519, 0.0
      %v1527 = vmul.f32 %v1524, %v1050
      %v1528 = vmul.f32 %v1525, %v1054
      %v1529 = vmul.f32 %v1526, %v1058
      %1530 = vst [vmem:[#allocation4 + $0x8] sm:$0xff] %v1527
      %1531 = vst [vmem:[#allocation4 + $0x10] sm:$0xff] %v1528
      %1532 = vst [vmem:[#allocation4 + $0x18] sm:$0xff] %v1529
      %v1533 = vld [vmem:[#allocation4] sm:$0xff]
      %v1534 = vld [vmem:[#allocation4 + $0x8] sm:$0xff]
      %v1535 = vld [vmem:[#allocation4 + $0x10] sm:$0xff]
      %v1536 = vld [vmem:[#allocation4 + $0x18] sm:$0xff]
      %1541 = vrot.lane.b32.xlu0 %v1533, 19
      %v1542 = vpop.permute.xlu0 %1541
      %1543 = vrot.lane.b32.xlu0 %v1534, 19
      %v1544 = vpop.permute.xlu0 %1543
      %1545 = vrot.lane.b32.xlu0 %v1535, 19
      %v1546 = vpop.permute.xlu0 %1545
      %1547 = vrot.lane.b32.xlu0 %v1536, 19
      %v1548 = vpop.permute.xlu0 %1547
      %v1549 = vsel %vm623, %v1542, %v1544
      %v1550 = vsel %vm623, %v1544, %v1546
      %v1551 = vsel %vm623, %v1546, %v1548
      %1555 = vst [vmem:[#allocation5] sm:$0xff] %v1549
      %1556 = vst [vmem:[#allocation5 + $0x8] sm:$0xff] %v1550
      %1557 = vst [vmem:[#allocation5 + $0x10] sm:$0xff] %v1551
      %v1558 = vld [vmem:[#allocation4] sm:$0xff]
      %v1559 = vld [vmem:[#allocation4 + $0x8] sm:$0xff]
      %v1560 = vld [vmem:[#allocation4 + $0x10] sm:$0xff]
      %v1561 = vld [vmem:[#allocation4 + $0x18] sm:$0xff]
      %1566 = vrot.lane.b32.xlu0 %v1558, 18
      %v1567 = vpop.permute.xlu0 %1566
      %1568 = vrot.lane.b32.xlu0 %v1559, 18
      %v1569 = vpop.permute.xlu0 %1568
      %1570 = vrot.lane.b32.xlu0 %v1560, 18
      %v1571 = vpop.permute.xlu0 %1570
      %1572 = vrot.lane.b32.xlu0 %v1561, 18
      %v1573 = vpop.permute.xlu0 %1572
      %v1574 = vsel %vm647, %v1567, %v1569
      %v1575 = vsel %vm647, %v1569, %v1571
      %v1576 = vsel %vm647, %v1571, %v1573
      %1580 = vst [vmem:[#allocation5 + $0x18] sm:$0xff] %v1574
      %1581 = vst [vmem:[#allocation5 + $0x20] sm:$0xff] %v1575
      %1582 = vst [vmem:[#allocation5 + $0x28] sm:$0xff] %v1576
      %v1583 = vld [vmem:[#allocation4] sm:$0xff]
      %v1584 = vld [vmem:[#allocation4 + $0x8] sm:$0xff]
      %v1585 = vld [vmem:[#allocation4 + $0x10] sm:$0xff]
      %v1586 = vld [vmem:[#allocation4 + $0x18] sm:$0xff]
      %1591 = vrot.lane.b32.xlu0 %v1583, 17
      %v1592 = vpop.permute.xlu0 %1591
      %1593 = vrot.lane.b32.xlu0 %v1584, 17
      %v1594 = vpop.permute.xlu0 %1593
      %1595 = vrot.lane.b32.xlu0 %v1585, 17
      %v1596 = vpop.permute.xlu0 %1595
      %1597 = vrot.lane.b32.xlu0 %v1586, 17
      %v1598 = vpop.permute.xlu0 %1597
      %v1599 = vsel %vm671, %v1592, %v1594
      %v1600 = vsel %vm671, %v1594, %v1596
      %v1601 = vsel %vm671, %v1596, %v1598
      %1605 = vst [vmem:[#allocation5 + $0x30] sm:$0xff] %v1599
      %1606 = vst [vmem:[#allocation5 + $0x38] sm:$0xff] %v1600
      %1607 = vst [vmem:[#allocation5 + $0x40] sm:$0xff] %v1601
      %v1608 = vld [vmem:[#allocation4] sm:$0xff]
      %v1609 = vld [vmem:[#allocation4 + $0x8] sm:$0xff]
      %v1610 = vld [vmem:[#allocation4 + $0x10] sm:$0xff]
      %v1611 = vld [vmem:[#allocation4 + $0x18] sm:$0xff]
      %1616 = vrot.lane.b32.xlu0 %v1608, 1
      %v1617 = vpop.permute.xlu0 %1616
      %1618 = vrot.lane.b32.xlu0 %v1609, 1
      %v1619 = vpop.permute.xlu0 %1618
      %1620 = vrot.lane.b32.xlu0 %v1610, 1
      %v1621 = vpop.permute.xlu0 %1620
      %1622 = vrot.lane.b32.xlu0 %v1611, 1
      %v1623 = vpop.permute.xlu0 %1622
      %v1624 = vsel %vm695, %v1617, %v1619
      %v1625 = vsel %vm695, %v1619, %v1621
      %v1626 = vsel %vm695, %v1621, %v1623
      %1630 = vst [vmem:[#allocation5 + $0x48] sm:$0xff] %v1624
      %1631 = vst [vmem:[#allocation5 + $0x50] sm:$0xff] %v1625
      %1632 = vst [vmem:[#allocation5 + $0x58] sm:$0xff] %v1626
      %v1633 = vld [vmem:[#allocation4 + $0x8] sm:$0xff]
      %v1634 = vld [vmem:[#allocation4 + $0x10] sm:$0xff]
      %v1635 = vld [vmem:[#allocation4 + $0x18] sm:$0xff]
      %1636 = vst [vmem:[#allocation5 + $0x60] sm:$0xff] %v1633
      %1637 = vst [vmem:[#allocation5 + $0x68] sm:$0xff] %v1634
      %1638 = vst [vmem:[#allocation5 + $0x70] sm:$0xff] %v1635
      %v1639 = vld [vmem:[#allocation4 + $0x8] sm:$0xff]
      %v1640 = vld [vmem:[#allocation4 + $0x10] sm:$0xff]
      %v1641 = vld [vmem:[#allocation4 + $0x18] sm:$0xff]
      %v1642 = vld [vmem:[#allocation4 + $0x20] sm:$0xff]
      %1647 = vrot.lane.b32.xlu0 %v1639, 127
      %v1648 = vpop.permute.xlu0 %1647
      %1649 = vrot.lane.b32.xlu0 %v1640, 127
      %v1650 = vpop.permute.xlu0 %1649
      %1651 = vrot.lane.b32.xlu0 %v1641, 127
      %v1652 = vpop.permute.xlu0 %1651
      %1653 = vrot.lane.b32.xlu0 %v1642, 127
      %v1654 = vpop.permute.xlu0 %1653
      %v1655 = vsel %vm727, %v1648, %v1650
      %v1656 = vsel %vm727, %v1650, %v1652
      %v1657 = vsel %vm727, %v1652, %v1654
      %1661 = vst [vmem:[#allocation5 + $0x78] sm:$0xff] %v1655
      %1662 = vst [vmem:[#allocation5 + $0x80] sm:$0xff] %v1656
      %1663 = vst [vmem:[#allocation5 + $0x88] sm:$0xff] %v1657
      %v1664 = vld [vmem:[#allocation4 + $0x8] sm:$0xff]
      %v1665 = vld [vmem:[#allocation4 + $0x10] sm:$0xff]
      %v1666 = vld [vmem:[#allocation4 + $0x18] sm:$0xff]
      %v1667 = vld [vmem:[#allocation4 + $0x20] sm:$0xff]
      %1672 = vrot.lane.b32.xlu0 %v1664, 111
      %v1673 = vpop.permute.xlu0 %1672
      %1674 = vrot.lane.b32.xlu0 %v1665, 111
      %v1675 = vpop.permute.xlu0 %1674
      %1676 = vrot.lane.b32.xlu0 %v1666, 111
      %v1677 = vpop.permute.xlu0 %1676
      %1678 = vrot.lane.b32.xlu0 %v1667, 111
      %v1679 = vpop.permute.xlu0 %1678
      %v1680 = vsel %vm751, %v1673, %v1675
      %v1681 = vsel %vm751, %v1675, %v1677
      %v1682 = vsel %vm751, %v1677, %v1679
      %1686 = vst [vmem:[#allocation5 + $0x90] sm:$0xff] %v1680
      %1687 = vst [vmem:[#allocation5 + $0x98] sm:$0xff] %v1681
      %1688 = vst [vmem:[#allocation5 + $0xa0] sm:$0xff] %v1682
      %v1689 = vld [vmem:[#allocation4 + $0x8] sm:$0xff]
      %v1690 = vld [vmem:[#allocation4 + $0x10] sm:$0xff]
      %v1691 = vld [vmem:[#allocation4 + $0x18] sm:$0xff]
      %v1692 = vld [vmem:[#allocation4 + $0x20] sm:$0xff]
      %1697 = vrot.lane.b32.xlu0 %v1689, 110
      %v1698 = vpop.permute.xlu0 %1697
      %1699 = vrot.lane.b32.xlu0 %v1690, 110
      %v1700 = vpop.permute.xlu0 %1699
      %1701 = vrot.lane.b32.xlu0 %v1691, 110
      %v1702 = vpop.permute.xlu0 %1701
      %1703 = vrot.lane.b32.xlu0 %v1692, 110
      %v1704 = vpop.permute.xlu0 %1703
      %v1705 = vsel %vm775, %v1698, %v1700
      %v1706 = vsel %vm775, %v1700, %v1702
      %v1707 = vsel %vm775, %v1702, %v1704
      %1711 = vst [vmem:[#allocation5 + $0xa8] sm:$0xff] %v1705
      %1712 = vst [vmem:[#allocation5 + $0xb0] sm:$0xff] %v1706
      %1713 = vst [vmem:[#allocation5 + $0xb8] sm:$0xff] %v1707
      %v1714 = vld [vmem:[#allocation4 + $0x8] sm:$0xff]
      %v1715 = vld [vmem:[#allocation4 + $0x10] sm:$0xff]
      %v1716 = vld [vmem:[#allocation4 + $0x18] sm:$0xff]
      %v1717 = vld [vmem:[#allocation4 + $0x20] sm:$0xff]
      %1722 = vrot.lane.b32.xlu0 %v1714, 109
      %v1723 = vpop.permute.xlu0 %1722
      %1724 = vrot.lane.b32.xlu0 %v1715, 109
      %v1725 = vpop.permute.xlu0 %1724
      %1726 = vrot.lane.b32.xlu0 %v1716, 109
      %v1727 = vpop.permute.xlu0 %1726
      %1728 = vrot.lane.b32.xlu0 %v1717, 109
      %v1729 = vpop.permute.xlu0 %1728
      %v1730 = vsel %vm799, %v1723, %v1725
      %v1731 = vsel %vm799, %v1725, %v1727
      %v1732 = vsel %vm799, %v1727, %v1729
      %1736 = vst [vmem:[#allocation5 + $0xc0] sm:$0xff] %v1730
      %1737 = vst [vmem:[#allocation5 + $0xc8] sm:$0xff] %v1731
      %1738 = vst [vmem:[#allocation5 + $0xd0] sm:$0xff] %v1732
      %v1739 = vld [vmem:[%s11] sm:$0x3]
      %v1740 = vld [vmem:[#allocation5] sm:$0xff]
      %v1741 = vld [vmem:[#allocation5 + $0x8] sm:$0xff]
      %v1742 = vld [vmem:[#allocation5 + $0x10] sm:$0xff]
      %v1743 = vld [vmem:[#allocation5 + $0x18] sm:$0xff]
      %v1744 = vld [vmem:[#allocation5 + $0x20] sm:$0xff]
      %v1745 = vld [vmem:[#allocation5 + $0x28] sm:$0xff]
      %v1746 = vld [vmem:[#allocation5 + $0x30] sm:$0xff]
      %v1747 = vld [vmem:[#allocation5 + $0x38] sm:$0xff]
      %v1748 = vld [vmem:[#allocation5 + $0x40] sm:$0xff]
      %v1749 = vld [vmem:[#allocation5 + $0x48] sm:$0xff]
      %v1750 = vld [vmem:[#allocation5 + $0x50] sm:$0xff]
      %v1751 = vld [vmem:[#allocation5 + $0x58] sm:$0xff]
      %v1752 = vld [vmem:[#allocation5 + $0x60] sm:$0xff]
      %v1753 = vld [vmem:[#allocation5 + $0x68] sm:$0xff]
      %v1754 = vld [vmem:[#allocation5 + $0x70] sm:$0xff]
      %v1755 = vld [vmem:[#allocation5 + $0x78] sm:$0xff]
      %v1756 = vld [vmem:[#allocation5 + $0x80] sm:$0xff]
      %v1757 = vld [vmem:[#allocation5 + $0x88] sm:$0xff]
      %v1758 = vld [vmem:[#allocation5 + $0x90] sm:$0xff]
      %v1759 = vld [vmem:[#allocation5 + $0x98] sm:$0xff]
      %v1760 = vld [vmem:[#allocation5 + $0xa0] sm:$0xff]
      %v1761 = vld [vmem:[#allocation5 + $0xa8] sm:$0xff]
      %v1762 = vld [vmem:[#allocation5 + $0xb0] sm:$0xff]
      %v1763 = vld [vmem:[#allocation5 + $0xb8] sm:$0xff]
      %v1764 = vld [vmem:[#allocation5 + $0xc0] sm:$0xff]
      %v1765 = vld [vmem:[#allocation5 + $0xc8] sm:$0xff]
      %v1766 = vld [vmem:[#allocation5 + $0xd0] sm:$0xff]
      %v1767 = vpack.c.bf16 %v1743, %v1740
      %v1768 = vpack.c.bf16 %v1744, %v1741
      %v1769 = vpack.c.bf16 %v1745, %v1742
      %v1770 = vpack.c.bf16 %v1749, %v1746
      %v1771 = vpack.c.bf16 %v1750, %v1747
      %v1772 = vpack.c.bf16 %v1751, %v1748
      %v1773 = vpack.c.bf16 %v1755, %v1752
      %v1774 = vpack.c.bf16 %v1756, %v1753
      %v1775 = vpack.c.bf16 %v1757, %v1754
      %v1776 = vpack.c.bf16 %v1761, %v1758
      %v1777 = vpack.c.bf16 %v1762, %v1759
      %v1778 = vpack.c.bf16 %v1763, %v1760
      %v1779 = vpack.c.bf16 %v1764, %v1764
      %v1780 = vpack.c.bf16 %v1765, %v1765
      %v1781 = vpack.c.bf16 %v1766, %v1766
      %v1782 = vld [vmem:[%s12] sm:$0xf]
      %1784 = vset.pattern.permute.xlu0 0
      %1785 = vperm.xlu0 %1784, %v1782
      %v1786 = vpop.permute.xlu0 %1785
      %v1789 = vsel %vm1323, %v1739, 0
      %v1792 = vsel %vm952, %v1779, 0
      %v1795 = vsel %vm952, %v1780, 0
      %v1798 = vsel %vm952, %v1781, 0
      %1800 = vmatprep.subr.bf16.mxu0 %v1768
      %1801 = vmatpush1.bf16.msra.mxu0 %v1767
      %1802 = vmatprep.subr.bf16.mxu0 %v1771
      %1803 = vmatpush1.bf16.msra.mxu0 %v1770
      %1804 = vmatprep.subr.bf16.mxu0 %v1774
      %1805 = vmatpush1.bf16.msra.mxu0 %v1773
      %1806 = vmatprep.subr.bf16.mxu0 %v1777
      %1807 = vmatpush1.bf16.msra.mxu0 %v1776
      %1808 = vmatprep.subr.bf16.mxu0 %v1795
      %1809 = vmatpush1.bf16.msra.mxu0 %v1792
      %1810 = vmatprep.subr.bf16.mxu0 0
      %1811 = vmatpush1.bf16.msra.mxu0 0
      %1812 = vmatprep.subr.bf16.mxu0 0
      %1813 = vmatpush1.bf16.msra.mxu0 0
      %1814 = vmatprep.subr.bf16.mxu0 0
      %1815 = vmatpush1.bf16.msra.mxu0 0
      %1816 = vmatprep.subr.bf16.mxu0 0
      %1817 = vmatpush1.bf16.msra.mxu0 0
      %1818 = vmatprep.subr.bf16.mxu0 0
      %1819 = vmatpush1.bf16.msra.mxu0 0
      %1820 = vmatprep.subr.bf16.mxu0 0
      %1821 = vmatpush1.bf16.msra.mxu0 0
      %1822 = vmatprep.subr.bf16.mxu0 0
      %1823 = vmatpush1.bf16.msra.mxu0 0
      %1824 = vmatprep.subr.bf16.mxu0 0
      %1825 = vmatpush1.bf16.msra.mxu0 0
      %1826 = vmatprep.subr.bf16.mxu0 0
      %1827 = vmatpush1.bf16.msra.mxu0 0
      %1828 = vmatprep.subr.bf16.mxu0 0
      %1829 = vmatpush1.bf16.msra.mxu0 0
      %1830 = vmatprep.subr.bf16.mxu0 0
      %1831 = vmatpush1.bf16.msra.mxu0 0
      %1832 = vmatprep.mubr.bf16.mxu0 0
      %1833 = vmatmul.mubr.bf16.gmra.mrb[0].mxu0 %v1789
      %v1834 = vpop.f32.mrb[0].mxu0
      %v1835 = vadd.f32 %v1786, %v1834
      %v1836 = vpop.f32.mrb[0].mxu0
      %v1837 = vadd.f32 %v1786, %v1836
      %v1838 = vpop.f32.mrb[0].mxu0
      %v1839 = vpop.f32.mrb[0].mxu0
      %1840 = vdwg.mxu0
      %1841 = vmatprep.subr.bf16.mxu0 0
      %1842 = vmatpush1.bf16.msra.mxu0 %v1769
      %1843 = vmatprep.subr.bf16.mxu0 0
      %1844 = vmatpush1.bf16.msra.mxu0 %v1772
      %1845 = vmatprep.subr.bf16.mxu0 0
      %1846 = vmatpush1.bf16.msra.mxu0 %v1775
      %1847 = vmatprep.subr.bf16.mxu0 0
      %1848 = vmatpush1.bf16.msra.mxu0 %v1778
      %1849 = vmatprep.subr.bf16.mxu0 0
      %1850 = vmatpush1.bf16.msra.mxu0 %v1798
      %1851 = vmatprep.subr.bf16.mxu0 0
      %1852 = vmatpush1.bf16.msra.mxu0 0
      %1853 = vmatprep.subr.bf16.mxu0 0
      %1854 = vmatpush1.bf16.msra.mxu0 0
      %1855 = vmatprep.subr.bf16.mxu0 0
      %1856 = vmatpush1.bf16.msra.mxu0 0
      %1857 = vmatprep.subr.bf16.mxu0 0
      %1858 = vmatpush1.bf16.msra.mxu0 0
      %1859 = vmatprep.subr.bf16.mxu0 0
      %1860 = vmatpush1.bf16.msra.mxu0 0
      %1861 = vmatprep.subr.bf16.mxu0 0
      %1862 = vmatpush1.bf16.msra.mxu0 0
      %1863 = vmatprep.subr.bf16.mxu0 0
      %1864 = vmatpush1.bf16.msra.mxu0 0
      %1865 = vmatprep.subr.bf16.mxu0 0
      %1866 = vmatpush1.bf16.msra.mxu0 0
      %1867 = vmatprep.subr.bf16.mxu0 0
      %1868 = vmatpush1.bf16.msra.mxu0 0
      %1869 = vmatprep.subr.bf16.mxu0 0
      %1870 = vmatpush1.bf16.msra.mxu0 0
      %1871 = vmatprep.subr.bf16.mxu0 0
      %1872 = vmatpush1.bf16.msra.mxu0 0
      %1873 = vmatprep.mubr.bf16.mxu0 0
      %1874 = vmatmul.mubr.bf16.gmra.mrb[0].mxu0 %v1789
      %v1875 = vpop.f32.mrb[0].mxu0
      %v1876 = vadd.f32 %v1786, %v1875
      %v1877 = vpop.f32.mrb[0].mxu0
      %v1878 = vpop.f32.mrb[0].mxu0
      %v1879 = vpop.f32.mrb[0].mxu0
      %1880 = vdwg.mxu0
      %v1881 = vmax.f32 %v1835, 0.0
      %v1882 = vmax.f32 %v1837, 0.0
      %v1883 = vmax.f32 %v1876, 0.0
      %v1884 = vld [vmem:[%s13] sm:$0xf]
      %v1885 = vld [vmem:[%s13 + $0x4] sm:$0xf]
      %v1886 = vld [vmem:[%s14] sm:$0xf]
      %v1887 = vld [vmem:[%s14 + $0x4] sm:$0xf]
      %v1890 = vunpack.c.l.b16 %v1886
      %v1891 = vunpack.c.l.b16 %v1887
      %v1892 = vpack.c.b16 %v1891, %v1890
      %v1894 = vsel %vm1430, %v1892, 0
      %1896 = vmatprep.subr.bf16.mxu0 %v1438
      %1897 = vmatpush1.bf16.msra.mxu0 %v1435
      %1898 = vmatprep.subr.bf16.mxu0 0
      %1899 = vmatpush1.bf16.msra.mxu0 0
      %1900 = vmatprep.subr.bf16.mxu0 0
      %1901 = vmatpush1.bf16.msra.mxu0 0
      %1902 = vmatprep.subr.bf16.mxu0 0
      %1903 = vmatpush1.bf16.msra.mxu0 0
      %1904 = vmatprep.subr.bf16.mxu0 0
      %1905 = vmatpush1.bf16.msra.mxu0 0
      %1906 = vmatprep.subr.bf16.mxu0 0
      %1907 = vmatpush1.bf16.msra.mxu0 0
      %1908 = vmatprep.subr.bf16.mxu0 0
      %1909 = vmatpush1.bf16.msra.mxu0 0
      %1910 = vmatprep.subr.bf16.mxu0 0
      %1911 = vmatpush1.bf16.msra.mxu0 0
      %1912 = vmatprep.subr.bf16.mxu0 0
      %1913 = vmatpush1.bf16.msra.mxu0 0
      %1914 = vmatprep.subr.bf16.mxu0 0
      %1915 = vmatpush1.bf16.msra.mxu0 0
      %1916 = vmatprep.subr.bf16.mxu0 0
      %1917 = vmatpush1.bf16.msra.mxu0 0
      %1918 = vmatprep.subr.bf16.mxu0 0
      %1919 = vmatpush1.bf16.msra.mxu0 0
      %1920 = vmatprep.subr.bf16.mxu0 0
      %1921 = vmatpush1.bf16.msra.mxu0 0
      %1922 = vmatprep.subr.bf16.mxu0 0
      %1923 = vmatpush1.bf16.msra.mxu0 0
      %1924 = vmatprep.subr.bf16.mxu0 0
      %1925 = vmatpush1.bf16.msra.mxu0 0
      %1926 = vmatprep.subr.bf16.mxu0 0
      %1927 = vmatpush1.bf16.msra.mxu0 0
      %1928 = vmatprep.mubr.bf16.mxu0 0
      %1929 = vmatmul.mubr.bf16.gmra.mrb[0].mxu0 %v1894
      %v1930 = vpop.f32.mrb[0].mxu0
      %v1931 = vadd.f32 0.0, %v1930
      %v1932 = vpop.f32.mrb[0].mxu0
      %v1933 = vadd.f32 0.0, %v1932
      %v1934 = vpop.f32.mrb[0].mxu0
      %v1935 = vadd.f32 0.0, %v1934
      %v1936 = vpop.f32.mrb[0].mxu0
      %v1937 = vadd.f32 0.0, %v1936
      %1938 = vdwg.mxu0
      %1939 = vmatprep.subr.bf16.mxu0 0
      %1940 = vmatpush1.bf16.msra.mxu0 %v1441
      %1941 = vmatprep.subr.bf16.mxu0 0
      %1942 = vmatpush1.bf16.msra.mxu0 0
      %1943 = vmatprep.subr.bf16.mxu0 0
      %1944 = vmatpush1.bf16.msra.mxu0 0
      %1945 = vmatprep.subr.bf16.mxu0 0
      %1946 = vmatpush1.bf16.msra.mxu0 0
      %1947 = vmatprep.subr.bf16.mxu0 0
      %1948 = vmatpush1.bf16.msra.mxu0 0
      %1949 = vmatprep.subr.bf16.mxu0 0
      %1950 = vmatpush1.bf16.msra.mxu0 0
      %1951 = vmatprep.subr.bf16.mxu0 0
      %1952 = vmatpush1.bf16.msra.mxu0 0
      %1953 = vmatprep.subr.bf16.mxu0 0
      %1954 = vmatpush1.bf16.msra.mxu0 0
      %1955 = vmatprep.subr.bf16.mxu0 0
      %1956 = vmatpush1.bf16.msra.mxu0 0
      %1957 = vmatprep.subr.bf16.mxu0 0
      %1958 = vmatpush1.bf16.msra.mxu0 0
      %1959 = vmatprep.subr.bf16.mxu0 0
      %1960 = vmatpush1.bf16.msra.mxu0 0
      %1961 = vmatprep.subr.bf16.mxu0 0
      %1962 = vmatpush1.bf16.msra.mxu0 0
      %1963 = vmatprep.subr.bf16.mxu0 0
      %1964 = vmatpush1.bf16.msra.mxu0 0
      %1965 = vmatprep.subr.bf16.mxu0 0
      %1966 = vmatpush1.bf16.msra.mxu0 0
      %1967 = vmatprep.subr.bf16.mxu0 0
      %1968 = vmatpush1.bf16.msra.mxu0 0
      %1969 = vmatprep.subr.bf16.mxu0 0
      %1970 = vmatpush1.bf16.msra.mxu0 0
      %1971 = vmatprep.mubr.bf16.mxu0 0
      %1972 = vmatmul.mubr.bf16.gmra.mrb[0].mxu0 %v1894
      %v1973 = vpop.f32.mrb[0].mxu0
      %v1974 = vadd.f32 0.0, %v1973
      %v1975 = vpop.f32.mrb[0].mxu0
      %v1976 = vpop.f32.mrb[0].mxu0
      %v1977 = vadd.f32 0.0, %v1976
      %v1978 = vpop.f32.mrb[0].mxu0
      %1979 = vdwg.mxu0
      %v1982 = vunpack.c.l.b16 %v1884
      %v1983 = vunpack.c.l.b16 %v1885
      %v1984 = vpack.c.b16 %v1983, %v1982
      %v1986 = vsel %vm948, %v1984, 0
      %1988 = vmatprep.subr.bf16.mxu0 %v957
      %1989 = vmatpush1.bf16.msra.mxu0 %v954
      %1990 = vmatprep.subr.bf16.mxu0 0
      %1991 = vmatpush1.bf16.msra.mxu0 0
      %1992 = vmatprep.subr.bf16.mxu0 0
      %1993 = vmatpush1.bf16.msra.mxu0 0
      %1994 = vmatprep.subr.bf16.mxu0 0
      %1995 = vmatpush1.bf16.msra.mxu0 0
      %1996 = vmatprep.subr.bf16.mxu0 0
      %1997 = vmatpush1.bf16.msra.mxu0 0
      %1998 = vmatprep.subr.bf16.mxu0 0
      %1999 = vmatpush1.bf16.msra.mxu0 0
      %2000 = vmatprep.subr.bf16.mxu0 0
      %2001 = vmatpush1.bf16.msra.mxu0 0
      %2002 = vmatprep.subr.bf16.mxu0 0
      %2003 = vmatpush1.bf16.msra.mxu0 0
      %2004 = vmatprep.subr.bf16.mxu0 0
      %2005 = vmatpush1.bf16.msra.mxu0 0
      %2006 = vmatprep.subr.bf16.mxu0 0
      %2007 = vmatpush1.bf16.msra.mxu0 0
      %2008 = vmatprep.subr.bf16.mxu0 0
      %2009 = vmatpush1.bf16.msra.mxu0 0
      %2010 = vmatprep.subr.bf16.mxu0 0
      %2011 = vmatpush1.bf16.msra.mxu0 0
      %2012 = vmatprep.subr.bf16.mxu0 0
      %2013 = vmatpush1.bf16.msra.mxu0 0
      %2014 = vmatprep.subr.bf16.mxu0 0
      %2015 = vmatpush1.bf16.msra.mxu0 0
      %2016 = vmatprep.subr.bf16.mxu0 0
      %2017 = vmatpush1.bf16.msra.mxu0 0
      %2018 = vmatprep.subr.bf16.mxu0 0
      %2019 = vmatpush1.bf16.msra.mxu0 0
      %2020 = vmatprep.mubr.bf16.mxu0 0
      %2021 = vmatmul.mubr.bf16.gmra.mrb[0].mxu0 %v1986
      %v2022 = vpop.f32.mrb[0].mxu0
      %v2023 = vadd.f32 %v1931, %v2022
      %v2024 = vpop.f32.mrb[0].mxu0
      %v2025 = vadd.f32 %v1933, %v2024
      %v2026 = vpop.f32.mrb[0].mxu0
      %v2027 = vadd.f32 %v1935, %v2026
      %v2028 = vpop.f32.mrb[0].mxu0
      %v2029 = vadd.f32 %v1937, %v2028
      %2030 = vdwg.mxu0
      %2031 = vmatprep.subr.bf16.mxu0 0
      %2032 = vmatpush1.bf16.msra.mxu0 %v960
      %2033 = vmatprep.subr.bf16.mxu0 0
      %2034 = vmatpush1.bf16.msra.mxu0 0
      %2035 = vmatprep.subr.bf16.mxu0 0
      %2036 = vmatpush1.bf16.msra.mxu0 0
      %2037 = vmatprep.subr.bf16.mxu0 0
      %2038 = vmatpush1.bf16.msra.mxu0 0
      %2039 = vmatprep.subr.bf16.mxu0 0
      %2040 = vmatpush1.bf16.msra.mxu0 0
      %2041 = vmatprep.subr.bf16.mxu0 0
      %2042 = vmatpush1.bf16.msra.mxu0 0
      %2043 = vmatprep.subr.bf16.mxu0 0
      %2044 = vmatpush1.bf16.msra.mxu0 0
      %2045 = vmatprep.subr.bf16.mxu0 0
      %2046 = vmatpush1.bf16.msra.mxu0 0
      %2047 = vmatprep.subr.bf16.mxu0 0
      %2048 = vmatpush1.bf16.msra.mxu0 0
      %2049 = vmatprep.subr.bf16.mxu0 0
      %2050 = vmatpush1.bf16.msra.mxu0 0
      %2051 = vmatprep.subr.bf16.mxu0 0
      %2052 = vmatpush1.bf16.msra.mxu0 0
      %2053 = vmatprep.subr.bf16.mxu0 0
      %2054 = vmatpush1.bf16.msra.mxu0 0
      %2055 = vmatprep.subr.bf16.mxu0 0
      %2056 = vmatpush1.bf16.msra.mxu0 0
      %2057 = vmatprep.subr.bf16.mxu0 0
      %2058 = vmatpush1.bf16.msra.mxu0 0
      %2059 = vmatprep.subr.bf16.mxu0 0
      %2060 = vmatpush1.bf16.msra.mxu0 0
      %2061 = vmatprep.subr.bf16.mxu0 0
      %2062 = vmatpush1.bf16.msra.mxu0 0
      %2063 = vmatprep.mubr.bf16.mxu0 0
      %2064 = vmatmul.mubr.bf16.gmra.mrb[0].mxu0 %v1986
      %v2065 = vpop.f32.mrb[0].mxu0
      %v2066 = vadd.f32 %v1974, %v2065
      %v2067 = vpop.f32.mrb[0].mxu0
      %v2068 = vpop.f32.mrb[0].mxu0
      %v2069 = vadd.f32 %v1977, %v2068
      %v2070 = vpop.f32.mrb[0].mxu0
      %2071 = vdwg.mxu0
      %v2072 = vld [vmem:[%s15] sm:$0xf]
      %v2073 = vld [vmem:[%s15 + $0x4] sm:$0xf]
      %v2074 = vpack.c.bf16 %v1881, %v1881
      %v2075 = vpack.c.bf16 %v1882, %v1882
      %v2076 = vpack.c.bf16 %v1883, %v1883
      %v2079 = vunpack.c.l.b16 %v2072
      %v2080 = vunpack.c.l.b16 %v2073
      %v2081 = vpack.c.b16 %v2080, %v2079
      %v2083 = vsel %vm1430, %v2081, 0
      %v2086 = vsel %vm844, %v2074, 0
      %v2089 = vsel %vm844, %v2075, 0
      %v2092 = vsel %vm844, %v2076, 0
      %2094 = vmatprep.subr.bf16.mxu0 %v2089
      %2095 = vmatpush1.bf16.msra.mxu0 %v2086
      %2096 = vmatprep.subr.bf16.mxu0 0
      %2097 = vmatpush1.bf16.msra.mxu0 0
      %2098 = vmatprep.subr.bf16.mxu0 0
      %2099 = vmatpush1.bf16.msra.mxu0 0
      %2100 = vmatprep.subr.bf16.mxu0 0
      %2101 = vmatpush1.bf16.msra.mxu0 0
      %2102 = vmatprep.subr.bf16.mxu0 0
      %2103 = vmatpush1.bf16.msra.mxu0 0
      %2104 = vmatprep.subr.bf16.mxu0 0
      %2105 = vmatpush1.bf16.msra.mxu0 0
      %2106 = vmatprep.subr.bf16.mxu0 0
      %2107 = vmatpush1.bf16.msra.mxu0 0
      %2108 = vmatprep.subr.bf16.mxu0 0
      %2109 = vmatpush1.bf16.msra.mxu0 0
      %2110 = vmatprep.subr.bf16.mxu0 0
      %2111 = vmatpush1.bf16.msra.mxu0 0
      %2112 = vmatprep.subr.bf16.mxu0 0
      %2113 = vmatpush1.bf16.msra.mxu0 0
      %2114 = vmatprep.subr.bf16.mxu0 0
      %2115 = vmatpush1.bf16.msra.mxu0 0
      %2116 = vmatprep.subr.bf16.mxu0 0
      %2117 = vmatpush1.bf16.msra.mxu0 0
      %2118 = vmatprep.subr.bf16.mxu0 0
      %2119 = vmatpush1.bf16.msra.mxu0 0
      %2120 = vmatprep.subr.bf16.mxu0 0
      %2121 = vmatpush1.bf16.msra.mxu0 0
      %2122 = vmatprep.subr.bf16.mxu0 0
      %2123 = vmatpush1.bf16.msra.mxu0 0
      %2124 = vmatprep.subr.bf16.mxu0 0
      %2125 = vmatpush1.bf16.msra.mxu0 0
      %2126 = vmatprep.mubr.bf16.mxu0 0
      %2127 = vmatmul.mubr.bf16.gmra.mrb[0].mxu0 %v2083
      %v2128 = vpop.f32.mrb[0].mxu0
      %v2129 = vadd.f32 0.0, %v2128
      %v2130 = vpop.f32.mrb[0].mxu0
      %v2131 = vadd.f32 0.0, %v2130
      %v2132 = vpop.f32.mrb[0].mxu0
      %v2133 = vadd.f32 0.0, %v2132
      %v2134 = vpop.f32.mrb[0].mxu0
      %v2135 = vadd.f32 0.0, %v2134
      %2136 = vdwg.mxu0
      %2137 = vmatprep.subr.bf16.mxu0 0
      %2138 = vmatpush1.bf16.msra.mxu0 %v2092
      %2139 = vmatprep.subr.bf16.mxu0 0
      %2140 = vmatpush1.bf16.msra.mxu0 0
      %2141 = vmatprep.subr.bf16.mxu0 0
      %2142 = vmatpush1.bf16.msra.mxu0 0
      %2143 = vmatprep.subr.bf16.mxu0 0
      %2144 = vmatpush1.bf16.msra.mxu0 0
      %2145 = vmatprep.subr.bf16.mxu0 0
      %2146 = vmatpush1.bf16.msra.mxu0 0
      %2147 = vmatprep.subr.bf16.mxu0 0
      %2148 = vmatpush1.bf16.msra.mxu0 0
      %2149 = vmatprep.subr.bf16.mxu0 0
      %2150 = vmatpush1.bf16.msra.mxu0 0
      %2151 = vmatprep.subr.bf16.mxu0 0
      %2152 = vmatpush1.bf16.msra.mxu0 0
      %2153 = vmatprep.subr.bf16.mxu0 0
      %2154 = vmatpush1.bf16.msra.mxu0 0
      %2155 = vmatprep.subr.bf16.mxu0 0
      %2156 = vmatpush1.bf16.msra.mxu0 0
      %2157 = vmatprep.subr.bf16.mxu0 0
      %2158 = vmatpush1.bf16.msra.mxu0 0
      %2159 = vmatprep.subr.bf16.mxu0 0
      %2160 = vmatpush1.bf16.msra.mxu0 0
      %2161 = vmatprep.subr.bf16.mxu0 0
      %2162 = vmatpush1.bf16.msra.mxu0 0
      %2163 = vmatprep.subr.bf16.mxu0 0
      %2164 = vmatpush1.bf16.msra.mxu0 0
      %2165 = vmatprep.subr.bf16.mxu0 0
      %2166 = vmatpush1.bf16.msra.mxu0 0
      %2167 = vmatprep.subr.bf16.mxu0 0
      %2168 = vmatpush1.bf16.msra.mxu0 0
      %2169 = vmatprep.mubr.bf16.mxu0 0
      %2170 = vmatmul.mubr.bf16.gmra.mrb[0].mxu0 %v2083
      %v2171 = vpop.f32.mrb[0].mxu0
      %v2172 = vadd.f32 0.0, %v2171
      %v2173 = vpop.f32.mrb[0].mxu0
      %v2174 = vpop.f32.mrb[0].mxu0
      %v2175 = vadd.f32 0.0, %v2174
      %v2176 = vpop.f32.mrb[0].mxu0
      %2177 = vdwg.mxu0
      %v2178 = vadd.f32 %v2023, %v2129
      %v2179 = vadd.f32 %v2025, %v2131
      %v2180 = vadd.f32 %v2066, %v2172
      %v2181 = vadd.f32 %v2027, %v2133
      %v2182 = vadd.f32 %v2029, %v2135
      %v2183 = vadd.f32 %v2069, %v2175
      %v2184 = vld [vmem:[%s16] sm:$0xf]
      %v2185 = vld [vmem:[%s16 + $0x4] sm:$0xf]
      %v2186 = vld [vmem:[%s590] sm:$0xff]
      %v2187 = vld [vmem:[%s590 + $0x8] sm:$0xf]
      %v2190 = vunpack.c.l.b16 %v2184
      %v2191 = vunpack.c.l.b16 %v2185
      %v2192 = vpack.c.b16 %v2191, %v2190
      %v2195 = vunpack.c.l.b16 %v2186
      %v2196 = vunpack.c.h.b16 %v2186
      %v2197 = vunpack.c.l.b16 %v2187
      %v2198 = vpack.c.b16 %v2195, %v2195
      %v2199 = vpack.c.b16 %v2196, %v2196
      %v2200 = vpack.c.b16 %v2197, %v2197
      %v2202 = vsel %vm948, %v2192, 0
      %v2205 = vsel %vm952, %v2198, 0
      %v2208 = vsel %vm952, %v2199, 0
      %v2211 = vsel %vm952, %v2200, 0
      %2213 = vmatprep.subr.bf16.mxu0 %v2208
      %2214 = vmatpush1.bf16.msra.mxu0 %v2205
      %2215 = vmatprep.subr.bf16.mxu0 0
      %2216 = vmatpush1.bf16.msra.mxu0 0
      %2217 = vmatprep.subr.bf16.mxu0 0
      %2218 = vmatpush1.bf16.msra.mxu0 0
      %2219 = vmatprep.subr.bf16.mxu0 0
      %2220 = vmatpush1.bf16.msra.mxu0 0
      %2221 = vmatprep.subr.bf16.mxu0 0
      %2222 = vmatpush1.bf16.msra.mxu0 0
      %2223 = vmatprep.subr.bf16.mxu0 0
      %2224 = vmatpush1.bf16.msra.mxu0 0
      %2225 = vmatprep.subr.bf16.mxu0 0
      %2226 = vmatpush1.bf16.msra.mxu0 0
      %2227 = vmatprep.subr.bf16.mxu0 0
      %2228 = vmatpush1.bf16.msra.mxu0 0
      %2229 = vmatprep.subr.bf16.mxu0 0
      %2230 = vmatpush1.bf16.msra.mxu0 0
      %2231 = vmatprep.subr.bf16.mxu0 0
      %2232 = vmatpush1.bf16.msra.mxu0 0
      %2233 = vmatprep.subr.bf16.mxu0 0
      %2234 = vmatpush1.bf16.msra.mxu0 0
      %2235 = vmatprep.subr.bf16.mxu0 0
      %2236 = vmatpush1.bf16.msra.mxu0 0
      %2237 = vmatprep.subr.bf16.mxu0 0
      %2238 = vmatpush1.bf16.msra.mxu0 0
      %2239 = vmatprep.subr.bf16.mxu0 0
      %2240 = vmatpush1.bf16.msra.mxu0 0
      %2241 = vmatprep.subr.bf16.mxu0 0
      %2242 = vmatpush1.bf16.msra.mxu0 0
      %2243 = vmatprep.subr.bf16.mxu0 0
      %2244 = vmatpush1.bf16.msra.mxu0 0
      %2245 = vmatprep.mubr.bf16.mxu0 0
      %2246 = vmatmul.mubr.bf16.gmra.mrb[0].mxu0 %v2202
      %v2247 = vpop.f32.mrb[0].mxu0
      %v2248 = vadd.f32 0.0, %v2247
      %v2249 = vpop.f32.mrb[0].mxu0
      %v2250 = vadd.f32 0.0, %v2249
      %v2251 = vpop.f32.mrb[0].mxu0
      %v2252 = vadd.f32 0.0, %v2251
      %v2253 = vpop.f32.mrb[0].mxu0
      %v2254 = vadd.f32 0.0, %v2253
      %2255 = vdwg.mxu0
      %2256 = vmatprep.subr.bf16.mxu0 0
      %2257 = vmatpush1.bf16.msra.mxu0 %v2211
      %2258 = vmatprep.subr.bf16.mxu0 0
      %2259 = vmatpush1.bf16.msra.mxu0 0
      %2260 = vmatprep.subr.bf16.mxu0 0
      %2261 = vmatpush1.bf16.msra.mxu0 0
      %2262 = vmatprep.subr.bf16.mxu0 0
      %2263 = vmatpush1.bf16.msra.mxu0 0
      %2264 = vmatprep.subr.bf16.mxu0 0
      %2265 = vmatpush1.bf16.msra.mxu0 0
      %2266 = vmatprep.subr.bf16.mxu0 0
      %2267 = vmatpush1.bf16.msra.mxu0 0
      %2268 = vmatprep.subr.bf16.mxu0 0
      %2269 = vmatpush1.bf16.msra.mxu0 0
      %2270 = vmatprep.subr.bf16.mxu0 0
      %2271 = vmatpush1.bf16.msra.mxu0 0
      %2272 = vmatprep.subr.bf16.mxu0 0
      %2273 = vmatpush1.bf16.msra.mxu0 0
      %2274 = vmatprep.subr.bf16.mxu0 0
      %2275 = vmatpush1.bf16.msra.mxu0 0
      %2276 = vmatprep.subr.bf16.mxu0 0
      %2277 = vmatpush1.bf16.msra.mxu0 0
      %2278 = vmatprep.subr.bf16.mxu0 0
      %2279 = vmatpush1.bf16.msra.mxu0 0
      %2280 = vmatprep.subr.bf16.mxu0 0
      %2281 = vmatpush1.bf16.msra.mxu0 0
      %2282 = vmatprep.subr.bf16.mxu0 0
      %2283 = vmatpush1.bf16.msra.mxu0 0
      %2284 = vmatprep.subr.bf16.mxu0 0
      %2285 = vmatpush1.bf16.msra.mxu0 0
      %2286 = vmatprep.subr.bf16.mxu0 0
      %2287 = vmatpush1.bf16.msra.mxu0 0
      %2288 = vmatprep.mubr.bf16.mxu0 0
      %2289 = vmatmul.mubr.bf16.gmra.mrb[0].mxu0 %v2202
      %v2290 = vpop.f32.mrb[0].mxu0
      %v2291 = vadd.f32 0.0, %v2290
      %v2292 = vpop.f32.mrb[0].mxu0
      %v2293 = vpop.f32.mrb[0].mxu0
      %v2294 = vadd.f32 0.0, %v2293
      %v2295 = vpop.f32.mrb[0].mxu0
      %2296 = vdwg.mxu0
      %v2297 = vadd.f32 %v2178, %v2248
      %v2298 = vadd.f32 %v2179, %v2250
      %v2299 = vadd.f32 %v2180, %v2291
      %v2300 = vadd.f32 %v2181, %v2252
      %v2301 = vadd.f32 %v2182, %v2254
      %v2302 = vadd.f32 %v2183, %v2294
      %v2303 = vld [vmem:[%s17] sm:$0xff]
      %v2304 = vld [vmem:[%s17 + $0x8] sm:$0xff]
      %2306 = vset.pattern.permute.xlu0 0
      %2307 = vperm.xlu0 %2306, %v2303
      %v2308 = vpop.permute.xlu0 %2307
      %2311 = vset.pattern.permute.xlu0 0
      %2312 = vperm.xlu0 %2311, %v2304
      %v2313 = vpop.permute.xlu0 %2312
      %v2315 = vadd.f32 %v2297, %v2308
      %v2316 = vadd.f32 %v2298, %v2308
      %v2317 = vadd.f32 %v2299, %v2308
      %v2318 = vadd.f32 %v2300, %v2313
      %v2319 = vadd.f32 %v2301, %v2313
      %v2320 = vadd.f32 %v2302, %v2313
      %v2321 = vmax.f32 %v2315, 0.0
      %v2322 = vmax.f32 %v2316, 0.0
      %v2323 = vmax.f32 %v2317, 0.0
      %v2324 = vmax.f32 %v2318, 0.0
      %v2325 = vmax.f32 %v2319, 0.0
      %v2326 = vmax.f32 %v2320, 0.0
      %2327 = vst [vmem:[%s595] sm:$0xff] %v2321
      %2328 = vst [vmem:[%s595 + $0x8] sm:$0xff] %v2322
      %2329 = vst [vmem:[%s595 + $0x10] sm:$0xff] %v2323
      %2330 = vst [vmem:[%s595 + $0x18] sm:$0xff] %v2324
      %2331 = vst [vmem:[%s595 + $0x20] sm:$0xff] %v2325
      %2332 = vst [vmem:[%s595 + $0x28] sm:$0xff] %v2326
      %p2333 = scmp.lt.s32.totalorder %s29, 1
      %s2334 = scalar_select %p2333, %s29, 1
      %s2335 = smul.addr %s2334, 6
      %s2336 = smul.addr %s2335, 8
      %s2337 = scalar_lea.vmem %s18, %s2336
      // Predicated region
      $region93: #{_selecsls_forward.1} parent=91 // pred_check
        %p2338 = pneg %p435
      $region94: #{_selecsls_forward.1} parent=91 // pred_check_branch
        %2340 = sbr.rel (%p2338) target = $region96
      $region95: #{_selecsls_forward.1} parent=91 // pred_region
        _
      $region96: #{_selecsls_forward.1} parent=91 // pred_fallthru
        _
    $region92: #{_selecsls_forward.1} parent=5 // pred_fallthru
      _
    %p2341 = scmp.le.s32.totalorder 2, %s24
    // Predicated region
    $region97: #{_selecsls_forward.1} parent=5 // pred_check
      %p2342 = pneg %p2341
    $region98: #{_selecsls_forward.1} parent=5 // pred_check_branch
      %2344 = sbr.rel (%p2342) target = $region100
    $region99: #{_selecsls_forward.1} parent=5 // pred_region
      %s2345 = ssub.s32 %s24, 2
      // Predicated region
      $region101: #{_selecsls_forward.1} parent=99 // pred_check
        %p2346 = pneg %p441
      $region102: #{_selecsls_forward.1} parent=99 // pred_check_branch
        %2348 = sbr.rel (%p2346) target = $region104
      $region103: #{_selecsls_forward.1} parent=99 // pred_region
        %p2349 = scmp.lt.s32.totalorder %s30, 1
        %s2350 = scalar_select %p2349, %s30, 1
        %s2351 = smul.addr %s2350, 6
        %s2352 = smul.addr %s2351, 8
        %s2353 = scalar_lea.vmem %s18, %s2352
      $region104: #{_selecsls_forward.1} parent=99 // pred_fallthru
        _
    $region100: #{_selecsls_forward.1} parent=5 // pred_fallthru
      _
  $region6: #{_selecsls_forward.1} parent=0 // loop_footer
    %s28 = sadd.s32 1, %s24
  $region7: #{_selecsls_forward.1} parent=0 // loop_footer_branch
    %23 = sbr.rel target = $region3
  $region8: #{_selecsls_forward.1} parent=0 // loop_exit
    _

</llo_original>
